<compile_context>
chip_gen: v6e
topology: v6e:2x2x1
jax: 0.10.0
libtpu: 0.0.40
codegen_flags: <defaults>
</compile_context>

<pallas_src>
import jax
import jax.numpy as jnp
from jax.experimental import pallas as pl
from jax.experimental.pallas import tpu as pltpu


def _gat_kernel(xp_src_ref, gT_ref, adst_ref, col_ref, b_ref, out_ref,
                m_sc, l_sc, acc_sc):
    """One (target-node tile, edge chunk) step: masked per-head online softmax + attn@xp."""
    tN, HC = out_ref.shape
    tE = col_ref.shape[1]
    heads = gT_ref.shape[0]
    C = HC // heads
    neg_slope = jnp.float32(0.2)          # PyG GATConv default negative_slope
    neg_big = jnp.float32(-1e30)
    i0 = pl.program_id(0) * tN            # first target node id of this tile
    je = pl.program_id(1)                 # edge-chunk index (reduction axis, "arbitrary")

    @pl.when(je == 0)
    def _():
        m_sc[...] = jnp.full_like(m_sc, neg_big)
        l_sc[...] = jnp.zeros_like(l_sc)
        acc_sc[...] = jnp.zeros_like(acc_sc)

    # ---- target mask for this tile; padded edges carry col = -1 (never matches) --------
    col = col_ref[...]                                                    # (1, tE)
    tgt = jax.lax.broadcasted_iota(jnp.int32, (tN, tE), 0) + i0
    tmask = tgt == col                                                    # (tN, tE)

    gT = gT_ref[...]                                                      # (heads, tE)
    adst = adst_ref[...]                                                  # (tN, heads)

    for h in range(heads):                 # static unroll, heads is tiny
        raw = adst[:, h:h + 1] + gT[h:h + 1, :]                           # (tN, tE)
        act = jnp.where(raw >= 0, raw, neg_slope * raw)                   # leaky_relu(0.2)
        logit = jnp.where(tmask, act, neg_big)

        # flash-style online softmax across edge chunks
        m_prev = m_sc[:, h:h + 1]                                         # (tN, 1)
        m_new = jnp.maximum(m_prev, jnp.max(logit, axis=1, keepdims=True))
        scale = jnp.exp(m_prev - m_new)
        p = jnp.where(tmask, jnp.exp(logit - m_new), jnp.float32(0.0))    # (tN, tE)

        l_sc[:, h:h + 1] = scale * l_sc[:, h:h + 1] + jnp.sum(p, axis=1, keepdims=True)
        acc_sc[:, h * C:(h + 1) * C] = (
            scale * acc_sc[:, h * C:(h + 1) * C]
            + jnp.dot(p, xp_src_ref[:, h * C:(h + 1) * C],
                      preferred_element_type=jnp.float32))                # (tN, C) on MXU
        m_sc[:, h:h + 1] = m_new

    @pl.when(je == pl.num_programs(1) - 1)
    def _():
        eps = jnp.float32(1e-20)           # padded target rows have l == 0; sliced off outside
        pieces = []
        for h in range(heads):
            denom = jnp.maximum(l_sc[:, h:h + 1], eps)
            pieces.append(acc_sc[:, h * C:(h + 1) * C] / denom)
        out = jnp.concatenate(pieces, axis=1) + b_ref[...]                # (tN, HC)
        out_ref[...] = jnp.where(out > 0, out, jnp.exp(out) - 1.0)        # ELU, one lane-dense store


def _add_self_loops_mean(edge_index, edge_attr, num_nodes):
    """PyG add_self_loops(fill_value='mean'): per-target mean of incoming edge_attr."""
    row = edge_index[0].astype(jnp.int32)
    col = edge_index[1].astype(jnp.int32)
    E = row.shape[0]
    ea = edge_attr.astype(jnp.float32)
    deg = jax.ops.segment_sum(jnp.ones((E,), jnp.float32), col, num_segments=num_nodes)
    loop_attr = jax.ops.segment_sum(ea, col, num_segments=num_nodes)
    loop_attr = loop_attr / jnp.maximum(deg, 1.0)[:, None]
    loop = jnp.arange(num_nodes, dtype=jnp.int32)
    return (jnp.concatenate([row, loop]),
            jnp.concatenate([col, loop]),
            jnp.concatenate([ea, loop_attr], axis=0))


def _round_up(v, m):
    return ((v + m - 1) // m) * m


def _vmem_limit_bytes():
    """Generation-aware VMEM limit: ~3/4 of capacity, capped at 100 MiB (v5e/v6e: 96 MiB, v7x: 48 MiB)."""
    cap = 64 * 1024 * 1024
    try:
        info = pltpu.get_tpu_info()
        cap = int(getattr(info, "vmem_capacity_bytes", cap))
    except Exception:
        pass
    return int(min(cap * 3 // 4, 100 * 1024 * 1024))


def node_gat_in_forward(x, edge_index, edge_attr, params, *, heads=4, out_channels=64,
                        u=None, batch=None, tile_n=128, tile_e=512):
    """JAX wrapper mirroring node_gat_in.forward (dropout=0.0, norm=False)."""
    del u, batch  # unused when norm=False
    N, F_node = x.shape
    C = out_channels
    HC = heads * C
    assert HC % 128 == 0

    hp = jax.lax.Precision.HIGHEST
    w_src = params["lin_weight"].astype(jnp.float32)            # (HC, F)
    w_edge = params["lin_edge_weight"].astype(jnp.float32)      # (HC, Fe)
    Fe = w_edge.shape[1]
    att_s = params["att_src"].reshape(heads, C).astype(jnp.float32)
    att_d = params["att_dst"].reshape(heads, C).astype(jnp.float32)
    att_e = params["att_edge"].reshape(heads, C).astype(jnp.float32)
    bias2d = params["bias"].reshape(1, HC).astype(jnp.float32)

    xf = x.astype(jnp.float32)

    # --- self loops (fill='mean') -----------------------------------------------------
    row, col, ea = _add_self_loops_mean(edge_index, edge_attr, N)
    Et = row.shape[0]

    # --- tile sizes and padding ---------------------------------------------------------
    tile_n = _round_up(max(8, min(tile_n, _round_up(N, 8))), 8)
    Np = _round_up(N, tile_n)
    Ep0 = _round_up(Et, 128)
    tile_e = _round_up(max(128, min(tile_e, Ep0)), 128)
    Ep = _round_up(Ep0, tile_e)

    pad_e = Ep - Et
    row_p = jnp.concatenate([row, jnp.zeros((pad_e,), jnp.int32)])       # padded rows -> node 0 (masked anyway)
    col_p = jnp.concatenate([col, jnp.full((pad_e,), -1, jnp.int32)])    # -1 sentinel never matches a target
    ea_p = jnp.concatenate([ea, jnp.zeros((pad_e, Fe), jnp.float32)], axis=0)

    # --- pre-contract attention vectors into the tiny weights --------------------------
    w3 = w_src.reshape(heads, C, F_node)
    w_as = jnp.einsum("hcf,hc->hf", w3, att_s, precision=hp)             # (heads, F)
    w_ad = jnp.einsum("hcf,hc->hf", w3, att_d, precision=hp)             # (heads, F)
    w_ae = jnp.einsum("hcf,hc->hf", w_edge.reshape(heads, C, Fe), att_e,
                      precision=hp)                                      # (heads, Fe)

    # --- tile-invariant work hoisted out of the grid (plain XLA, HIGHEST precision) ----
    xp_all = jnp.dot(xf, w_src.T, precision=hp)                          # (N, HC) projection
    a_src = jnp.einsum("nf,hf->nh", xf, w_as, precision=hp)              # (N, heads)
    a_dst = jnp.einsum("nf,hf->nh", xf, w_ad, precision=hp)              # (N, heads)
    a_edge = jnp.einsum("ef,hf->eh", ea_p, w_ae, precision=hp)           # (Ep, heads)

    xp_src = jnp.take(xp_all, row_p, axis=0)                             # (Ep, HC) per-edge source feats
    g_T = (jnp.take(a_src, row_p, axis=0) + a_edge).T                    # (heads, Ep)
    a_dst_p = jnp.pad(a_dst, ((0, Np - N), (0, 0)))                      # (Np, heads)

    n_i = Np // tile_n
    n_j = Ep // tile_e

    cost = pl.CostEstimate(
        flops=int(2 * Np * Ep * HC + 10 * heads * Np * Ep + 4 * Np * HC),
        transcendentals=int(heads * Np * Ep + 2 * heads * Np * n_j + Np * HC),
        bytes_accessed=int(4 * (n_i * n_j * (tile_e * HC + heads * tile_e + tile_n * heads
                                             + tile_e + HC) + Np * HC)),
    )

    out = pl.pallas_call(
        _gat_kernel,
        out_shape=jax.ShapeDtypeStruct((Np, HC), jnp.float32),
        grid_spec=pltpu.PrefetchScalarGridSpec(
            num_scalar_prefetch=0,
            grid=(n_i, n_j),                                    # node tiles (parallel) x edge chunks (reduction, last)
            in_specs=[
                pl.BlockSpec((tile_e, HC), lambda i, j: (j, 0)),      # xp_src edge chunk
                pl.BlockSpec((heads, tile_e), lambda i, j: (0, j)),   # g^T edge chunk (lane-dense)
                pl.BlockSpec((tile_n, heads), lambda i, j: (i, 0)),   # a_dst node tile
                pl.BlockSpec((1, tile_e), lambda i, j: (0, j)),       # col ids chunk (lane layout)
                pl.BlockSpec((1, HC), lambda i, j: (0, 0)),           # bias
            ],
            out_specs=pl.BlockSpec((tile_n, HC), lambda i, j: (i, 0)),
            scratch_shapes=[
                pltpu.VMEM((tile_n, heads), jnp.float32),             # running max m
                pltpu.VMEM((tile_n, heads), jnp.float32),             # running denom l
                pltpu.VMEM((tile_n, HC), jnp.float32),                # running numerator acc
            ],
        ),
        compiler_params=pltpu.CompilerParams(
            dimension_semantics=("parallel", "arbitrary"),
            vmem_limit_bytes=_vmem_limit_bytes(),
        ),
        cost_estimate=cost,
    )(xp_src, g_T, a_dst_p, col_p.reshape(1, Ep), bias2d)
    return out[:N]


def _reference(x, edge_index, edge_attr, params, *, heads=4, out_channels=64,
               negative_slope=0.2):
    """Pure-JAX reference (edge-based, faithful to PyG GATConv + ELU)."""
    hp = jax.lax.Precision.HIGHEST
    N = x.shape[0]
    C = out_channels
    HC = heads * C
    w_src = params["lin_weight"].astype(jnp.float32)
    w_edge = params["lin_edge_weight"].astype(jnp.float32)
    att_s = params["att_src"].reshape(heads, C)
    att_d = params["att_dst"].reshape(heads, C)
    att_e = params["att_edge"].reshape(heads, C)
    bias = params["bias"]

    row, col, ea = _add_self_loops_mean(edge_index, edge_attr, N)
    xp = jnp.dot(x.astype(jnp.float32), w_src.T, precision=hp).reshape(N, heads, C)
    a_src = (xp * att_s[None]).sum(-1)                      # (N, heads)
    a_dst = (xp * att_d[None]).sum(-1)
    ep = jnp.dot(ea, w_edge.T, precision=hp).reshape(-1, heads, C)
    a_edge = (ep * att_e[None]).sum(-1)                     # (Et, heads)

    alpha = a_src[row] + a_dst[col] + a_edge
    alpha = jnp.where(alpha >= 0, alpha, negative_slope * alpha)
    amax = jax.ops.segment_max(alpha, col, num_segments=N)
    alpha = jnp.exp(alpha - amax[col])
    denom = jax.ops.segment_sum(alpha, col, num_segments=N)
    alpha = alpha / denom[col]
    msg = xp[row] * alpha[:, :, None]
    out = jax.ops.segment_sum(msg, col, num_segments=N).reshape(N, HC) + bias
    return jax.nn.elu(out)


if __name__ == "__main__":
    # node_gat_in(node_features=5, out_features=64, heads=4, edge_features=1), small graph.
    N, F_NODE, F_EDGE, E = 16, 5, 1, 64
    HEADS, C_OUT = 4, 64

    key = jax.random.PRNGKey(0)
    ks = jax.random.split(key, 10)
    x = jax.random.normal(ks[0], (N, F_NODE), jnp.float32)
    row = jax.random.randint(ks[1], (E,), 0, N, jnp.int32)
    col = jax.random.randint(ks[2], (E,), 0, N, jnp.int32)
    edge_index = jnp.stack([row, col], axis=0)                       # (2, E)
    edge_attr = jax.random.normal(ks[3], (E, F_EDGE), jnp.float32)

    params = {
        "lin_weight": 0.3 * jax.random.normal(ks[4], (HEADS * C_OUT, F_NODE), jnp.float32),
        "lin_edge_weight": 0.3 * jax.random.normal(ks[5], (HEADS * C_OUT, F_EDGE), jnp.float32),
        "att_src": 0.1 * jax.random.normal(ks[6], (1, HEADS, C_OUT), jnp.float32),
        "att_dst": 0.1 * jax.random.normal(ks[7], (1, HEADS, C_OUT), jnp.float32),
        "att_edge": 0.1 * jax.random.normal(ks[8], (1, HEADS, C_OUT), jnp.float32),
        "bias": 0.1 * jax.random.normal(ks[9], (HEADS * C_OUT,), jnp.float32),
    }

    out = node_gat_in_forward(x, edge_index, edge_attr, params,
                              heads=HEADS, out_channels=C_OUT)
    jax.block_until_ready(out)

    ref = _reference(x, edge_index, edge_attr, params, heads=HEADS, out_channels=C_OUT)
    assert out.shape == (N, HEADS * C_OUT)
    assert jnp.allclose(out, ref, atol=2e-3, rtol=2e-3), float(jnp.max(jnp.abs(out - ref)))

    print("KERNEL_OK")
</pallas_src>

<mosaic_0001>
module attributes {stable_mosaic.version = 11 : i64} {
  func.func @_gat_kernel(%arg0: i32, %arg1: i32, %arg2: memref<128x256xf32, #tpu.memory_space<vmem>>, %arg3: memref<4x128xf32, #tpu.memory_space<vmem>>, %arg4: memref<16x4xf32, #tpu.memory_space<vmem>>, %arg5: memref<1x128xi32, #tpu.memory_space<vmem>>, %arg6: memref<1x256xf32, #tpu.memory_space<vmem>>, %arg7: memref<16x256xf32, #tpu.memory_space<vmem>>, %arg8: memref<16x4xf32, #tpu.memory_space<vmem>>, %arg9: memref<16x4xf32, #tpu.memory_space<vmem>>, %arg10: memref<16x256xf32, #tpu.memory_space<vmem>>) attributes {dimension_semantics = [#tpu.dimension_semantics<parallel>, #tpu.dimension_semantics<arbitrary>], iteration_bounds = array<i64: 1, 1>, scalar_prefetch = 0 : i64, scratch_operands = 3 : i64, tpu.core_type = #tpu.core_type<tc>, window_params = [{transform_indices = @transform_0, window_bounds = array<i64: 128, 256>}, {transform_indices = @transform_1, window_bounds = array<i64: 4, 128>}, {transform_indices = @transform_2, window_bounds = array<i64: 16, 4>}, {transform_indices = @transform_3, window_bounds = array<i64: 1, 128>}, {pipeline_mode = #tpu.pipeline_mode<synchronous>, transform_indices = @transform_4, window_bounds = array<i64: 1, 256>}, {transform_indices = @transform_5, window_bounds = array<i64: 16, 256>}]} {
    %c16_i32 = arith.constant 16 : i32
    %0 = arith.muli %arg0, %c16_i32 : i32
    %c0_i32 = arith.constant 0 : i32
    %1 = arith.cmpi eq, %arg1, %c0_i32 : i32
    %2 = arith.extui %1 : i1 to i32
    %cst = arith.constant -1.000000e+30 : f32
    %c0_i32_0 = arith.constant 0 : i32
    %3 = arith.cmpi ne, %2, %c0_i32_0 : i32
    scf.if %3 {
      %163 = vector.broadcast %cst : f32 to vector<16x4xf32>
      %c0_86 = arith.constant 0 : index
      %c0_87 = arith.constant 0 : index
      %164 = vector.load %arg8[%c0_86, %c0_87] : memref<16x4xf32, #tpu.memory_space<vmem>>, vector<16x4xf32>
      tpu.vector_store %arg8[%c0_86, %c0_87], %163 {strides = array<i32>} : memref<16x4xf32, #tpu.memory_space<vmem>>, vector<16x4xf32>,
      %cst_88 = arith.constant 0.000000e+00 : f32
      %165 = vector.broadcast %cst_88 : f32 to vector<16x4xf32>
      %c0_89 = arith.constant 0 : index
      %c0_90 = arith.constant 0 : index
      %166 = vector.load %arg9[%c0_89, %c0_90] : memref<16x4xf32, #tpu.memory_space<vmem>>, vector<16x4xf32>
      tpu.vector_store %arg9[%c0_89, %c0_90], %165 {strides = array<i32>} : memref<16x4xf32, #tpu.memory_space<vmem>>, vector<16x4xf32>,
      %cst_91 = arith.constant 0.000000e+00 : f32
      %167 = vector.broadcast %cst_91 : f32 to vector<16x256xf32>
      %c0_92 = arith.constant 0 : index
      %c0_93 = arith.constant 0 : index
      %168 = vector.load %arg10[%c0_92, %c0_93] : memref<16x256xf32, #tpu.memory_space<vmem>>, vector<16x256xf32>
      tpu.vector_store %arg10[%c0_92, %c0_93], %167 {strides = array<i32>} : memref<16x256xf32, #tpu.memory_space<vmem>>, vector<16x256xf32>,
    } else {
    }
    %c0 = arith.constant 0 : index
    %c0_1 = arith.constant 0 : index
    %4 = vector.load %arg5[%c0, %c0_1] : memref<1x128xi32, #tpu.memory_space<vmem>>, vector<1x128xi32>
    %5 = tpu.iota {dimensions = array<i32: 0>} : vector<16x128xi32>
    %6 = vector.broadcast %0 : i32 to vector<16x128xi32>
    %7 = arith.addi %5, %6 : vector<16x128xi32>
    %8 = vector.broadcast %4 : vector<1x128xi32> to vector<16x128xi32>
    %9 = arith.cmpi eq, %7, %8 : vector<16x128xi32>
    %c0_2 = arith.constant 0 : index
    %c0_3 = arith.constant 0 : index
    %10 = vector.load %arg3[%c0_2, %c0_3] : memref<4x128xf32, #tpu.memory_space<vmem>>, vector<4x128xf32>
    %c0_4 = arith.constant 0 : index
    %c0_5 = arith.constant 0 : index
    %11 = vector.load %arg4[%c0_4, %c0_5] : memref<16x4xf32, #tpu.memory_space<vmem>>, vector<16x4xf32>
    %12 = vector.extract_strided_slice %11 {offsets = [0, 0], sizes = [16, 1], strides = [1, 1]} : vector<16x4xf32> to vector<16x1xf32>
    %13 = vector.extract_strided_slice %10 {offsets = [0, 0], sizes = [1, 128], strides = [1, 1]} : vector<4x128xf32> to vector<1x128xf32>
    %14 = vector.broadcast %12 : vector<16x1xf32> to vector<16x128xf32>
    %15 = vector.broadcast %13 : vector<1x128xf32> to vector<16x128xf32>
    %16 = arith.addf %14, %15 : vector<16x128xf32>
    %cst_6 = arith.constant 0.000000e+00 : f32
    %17 = vector.broadcast %cst_6 : f32 to vector<16x128xf32>
    %18 = arith.cmpf oge, %16, %17 : vector<16x128xf32>
    %cst_7 = arith.constant 2.000000e-01 : f32
    %19 = vector.broadcast %cst_7 : f32 to vector<16x128xf32>
    %20 = arith.mulf %19, %16 : vector<16x128xf32>
    %21 = arith.select %18, %16, %20 : vector<16x128xi1>, vector<16x128xf32>
    %cst_8 = arith.constant -1.000000e+30 : f32
    %22 = vector.broadcast %cst_8 : f32 to vector<16x128xf32>
    %23 = arith.select %9, %21, %22 : vector<16x128xi1>, vector<16x128xf32>
    %c0_9 = arith.constant 0 : index
    %c0_10 = arith.constant 0 : index
    %24 = vector.load %arg8[%c0_9, %c0_10] : memref<16x4xf32, #tpu.memory_space<vmem>>, vector<16x1xf32>
    %cst_11 = arith.constant dense<0xFF800000> : vector<16xf32>
    %25 = vector.multi_reduction <maximumf>, %23, %cst_11 [1] : vector<16x128xf32> to vector<16xf32>
    %26 = vector.shape_cast %25 : vector<16xf32> to vector<16x1xf32>
    %27 = arith.maximumf %24, %26 : vector<16x1xf32>
    %28 = arith.subf %24, %27 : vector<16x1xf32>
    %29 = math.exp %28 : vector<16x1xf32>
    %30 = vector.broadcast %27 : vector<16x1xf32> to vector<16x128xf32>
    %31 = arith.subf %23, %30 : vector<16x128xf32>
    %32 = math.exp %31 : vector<16x128xf32>
    %cst_12 = arith.constant 0.000000e+00 : f32
    %33 = vector.broadcast %cst_12 : f32 to vector<16x128xf32>
    %34 = arith.select %9, %32, %33 : vector<16x128xi1>, vector<16x128xf32>
    %c0_13 = arith.constant 0 : index
    %c0_14 = arith.constant 0 : index
    %35 = vector.load %arg9[%c0_13, %c0_14] : memref<16x4xf32, #tpu.memory_space<vmem>>, vector<16x1xf32>
    %36 = arith.mulf %29, %35 : vector<16x1xf32>
    %cst_15 = arith.constant dense<0.000000e+00> : vector<16xf32>
    %37 = vector.multi_reduction <add>, %34, %cst_15 [1] : vector<16x128xf32> to vector<16xf32>
    %38 = vector.shape_cast %37 : vector<16xf32> to vector<16x1xf32>
    %39 = arith.addf %36, %38 : vector<16x1xf32>
    %c0_16 = arith.constant 0 : index
    %c0_17 = arith.constant 0 : index
    %40 = vector.load %arg9[%c0_16, %c0_17] : memref<16x4xf32, #tpu.memory_space<vmem>>, vector<16x1xf32>
    tpu.vector_store %arg9[%c0_16, %c0_17], %39 {strides = array<i32>} : memref<16x4xf32, #tpu.memory_space<vmem>>, vector<16x1xf32>,
    %c0_18 = arith.constant 0 : index
    %c0_19 = arith.constant 0 : index
    %41 = vector.load %arg10[%c0_18, %c0_19] : memref<16x256xf32, #tpu.memory_space<vmem>>, vector<16x64xf32>
    %42 = vector.broadcast %29 : vector<16x1xf32> to vector<16x64xf32>
    %43 = arith.mulf %42, %41 : vector<16x64xf32>
    %c0_20 = arith.constant 0 : index
    %c0_21 = arith.constant 0 : index
    %44 = vector.load %arg2[%c0_20, %c0_21] : memref<128x256xf32, #tpu.memory_space<vmem>>, vector<128x64xf32>
    %cst_22 = arith.constant dense<0.000000e+00> : vector<16x64xf32>
    %45 = tpu.matmul %34, %44, %cst_22 {dimension_numbers = #tpu.dot_dimension_numbers<[1], [0], [0], [1], [0, 0, 1, 1], [], []>} : vector<16x128xf32>, vector<128x64xf32>, vector<16x64xf32> -> vector<16x64xf32>
    %46 = arith.addf %43, %45 : vector<16x64xf32>
    %c0_23 = arith.constant 0 : index
    %c0_24 = arith.constant 0 : index
    %47 = vector.load %arg10[%c0_23, %c0_24] : memref<16x256xf32, #tpu.memory_space<vmem>>, vector<16x64xf32>
    tpu.vector_store %arg10[%c0_23, %c0_24], %46 {strides = array<i32>} : memref<16x256xf32, #tpu.memory_space<vmem>>, vector<16x64xf32>,
    %c0_25 = arith.constant 0 : index
    %c0_26 = arith.constant 0 : index
    %48 = vector.load %arg8[%c0_25, %c0_26] : memref<16x4xf32, #tpu.memory_space<vmem>>, vector<16x1xf32>
    tpu.vector_store %arg8[%c0_25, %c0_26], %27 {strides = array<i32>} : memref<16x4xf32, #tpu.memory_space<vmem>>, vector<16x1xf32>,
    %49 = vector.extract_strided_slice %11 {offsets = [0, 1], sizes = [16, 1], strides = [1, 1]} : vector<16x4xf32> to vector<16x1xf32>
    %50 = vector.extract_strided_slice %10 {offsets = [1, 0], sizes = [1, 128], strides = [1, 1]} : vector<4x128xf32> to vector<1x128xf32>
    %51 = vector.broadcast %49 : vector<16x1xf32> to vector<16x128xf32>
    %52 = vector.broadcast %50 : vector<1x128xf32> to vector<16x128xf32>
    %53 = arith.addf %51, %52 : vector<16x128xf32>
    %cst_27 = arith.constant 0.000000e+00 : f32
    %54 = vector.broadcast %cst_27 : f32 to vector<16x128xf32>
    %55 = arith.cmpf oge, %53, %54 : vector<16x128xf32>
    %cst_28 = arith.constant 2.000000e-01 : f32
    %56 = vector.broadcast %cst_28 : f32 to vector<16x128xf32>
    %57 = arith.mulf %56, %53 : vector<16x128xf32>
    %58 = arith.select %55, %53, %57 : vector<16x128xi1>, vector<16x128xf32>
    %cst_29 = arith.constant -1.000000e+30 : f32
    %59 = vector.broadcast %cst_29 : f32 to vector<16x128xf32>
    %60 = arith.select %9, %58, %59 : vector<16x128xi1>, vector<16x128xf32>
    %c0_30 = arith.constant 0 : index
    %c1 = arith.constant 1 : index
    %61 = vector.load %arg8[%c0_30, %c1] : memref<16x4xf32, #tpu.memory_space<vmem>>, vector<16x1xf32>
    %cst_31 = arith.constant dense<0xFF800000> : vector<16xf32>
    %62 = vector.multi_reduction <maximumf>, %60, %cst_31 [1] : vector<16x128xf32> to vector<16xf32>
    %63 = vector.shape_cast %62 : vector<16xf32> to vector<16x1xf32>
    %64 = arith.maximumf %61, %63 : vector<16x1xf32>
    %65 = arith.subf %61, %64 : vector<16x1xf32>
    %66 = math.exp %65 : vector<16x1xf32>
    %67 = vector.broadcast %64 : vector<16x1xf32> to vector<16x128xf32>
    %68 = arith.subf %60, %67 : vector<16x128xf32>
    %69 = math.exp %68 : vector<16x128xf32>
    %cst_32 = arith.constant 0.000000e+00 : f32
    %70 = vector.broadcast %cst_32 : f32 to vector<16x128xf32>
    %71 = arith.select %9, %69, %70 : vector<16x128xi1>, vector<16x128xf32>
    %c0_33 = arith.constant 0 : index
    %c1_34 = arith.constant 1 : index
    %72 = vector.load %arg9[%c0_33, %c1_34] : memref<16x4xf32, #tpu.memory_space<vmem>>, vector<16x1xf32>
    %73 = arith.mulf %66, %72 : vector<16x1xf32>
    %cst_35 = arith.constant dense<0.000000e+00> : vector<16xf32>
    %74 = vector.multi_reduction <add>, %71, %cst_35 [1] : vector<16x128xf32> to vector<16xf32>
    %75 = vector.shape_cast %74 : vector<16xf32> to vector<16x1xf32>
    %76 = arith.addf %73, %75 : vector<16x1xf32>
    %c0_36 = arith.constant 0 : index
    %c1_37 = arith.constant 1 : index
    %77 = vector.load %arg9[%c0_36, %c1_37] : memref<16x4xf32, #tpu.memory_space<vmem>>, vector<16x1xf32>
    tpu.vector_store %arg9[%c0_36, %c1_37], %76 {strides = array<i32>} : memref<16x4xf32, #tpu.memory_space<vmem>>, vector<16x1xf32>,
    %c0_38 = arith.constant 0 : index
    %c64 = arith.constant 64 : index
    %78 = vector.load %arg10[%c0_38, %c64] : memref<16x256xf32, #tpu.memory_space<vmem>>, vector<16x64xf32>
    %79 = vector.broadcast %66 : vector<16x1xf32> to vector<16x64xf32>
    %80 = arith.mulf %79, %78 : vector<16x64xf32>
    %c0_39 = arith.constant 0 : index
    %c64_40 = arith.constant 64 : index
    %81 = vector.load %arg2[%c0_39, %c64_40] : memref<128x256xf32, #tpu.memory_space<vmem>>, vector<128x64xf32>
    %cst_41 = arith.constant dense<0.000000e+00> : vector<16x64xf32>
    %82 = tpu.matmul %71, %81, %cst_41 {dimension_numbers = #tpu.dot_dimension_numbers<[1], [0], [0], [1], [0, 0, 1, 1], [], []>} : vector<16x128xf32>, vector<128x64xf32>, vector<16x64xf32> -> vector<16x64xf32>
    %83 = arith.addf %80, %82 : vector<16x64xf32>
    %c0_42 = arith.constant 0 : index
    %c64_43 = arith.constant 64 : index
    %84 = vector.load %arg10[%c0_42, %c64_43] : memref<16x256xf32, #tpu.memory_space<vmem>>, vector<16x64xf32>
    tpu.vector_store %arg10[%c0_42, %c64_43], %83 {strides = array<i32>} : memref<16x256xf32, #tpu.memory_space<vmem>>, vector<16x64xf32>,
    %c0_44 = arith.constant 0 : index
    %c1_45 = arith.constant 1 : index
    %85 = vector.load %arg8[%c0_44, %c1_45] : memref<16x4xf32, #tpu.memory_space<vmem>>, vector<16x1xf32>
    tpu.vector_store %arg8[%c0_44, %c1_45], %64 {strides = array<i32>} : memref<16x4xf32, #tpu.memory_space<vmem>>, vector<16x1xf32>,
    %86 = vector.extract_strided_slice %11 {offsets = [0, 2], sizes = [16, 1], strides = [1, 1]} : vector<16x4xf32> to vector<16x1xf32>
    %87 = vector.extract_strided_slice %10 {offsets = [2, 0], sizes = [1, 128], strides = [1, 1]} : vector<4x128xf32> to vector<1x128xf32>
    %88 = vector.broadcast %86 : vector<16x1xf32> to vector<16x128xf32>
    %89 = vector.broadcast %87 : vector<1x128xf32> to vector<16x128xf32>
    %90 = arith.addf %88, %89 : vector<16x128xf32>
    %cst_46 = arith.constant 0.000000e+00 : f32
    %91 = vector.broadcast %cst_46 : f32 to vector<16x128xf32>
    %92 = arith.cmpf oge, %90, %91 : vector<16x128xf32>
    %cst_47 = arith.constant 2.000000e-01 : f32
    %93 = vector.broadcast %cst_47 : f32 to vector<16x128xf32>
    %94 = arith.mulf %93, %90 : vector<16x128xf32>
    %95 = arith.select %92, %90, %94 : vector<16x128xi1>, vector<16x128xf32>
    %cst_48 = arith.constant -1.000000e+30 : f32
    %96 = vector.broadcast %cst_48 : f32 to vector<16x128xf32>
    %97 = arith.select %9, %95, %96 : vector<16x128xi1>, vector<16x128xf32>
    %c0_49 = arith.constant 0 : index
    %c2 = arith.constant 2 : index
    %98 = vector.load %arg8[%c0_49, %c2] : memref<16x4xf32, #tpu.memory_space<vmem>>, vector<16x1xf32>
    %cst_50 = arith.constant dense<0xFF800000> : vector<16xf32>
    %99 = vector.multi_reduction <maximumf>, %97, %cst_50 [1] : vector<16x128xf32> to vector<16xf32>
    %100 = vector.shape_cast %99 : vector<16xf32> to vector<16x1xf32>
    %101 = arith.maximumf %98, %100 : vector<16x1xf32>
    %102 = arith.subf %98, %101 : vector<16x1xf32>
    %103 = math.exp %102 : vector<16x1xf32>
    %104 = vector.broadcast %101 : vector<16x1xf32> to vector<16x128xf32>
    %105 = arith.subf %97, %104 : vector<16x128xf32>
    %106 = math.exp %105 : vector<16x128xf32>
    %cst_51 = arith.constant 0.000000e+00 : f32
    %107 = vector.broadcast %cst_51 : f32 to vector<16x128xf32>
    %108 = arith.select %9, %106, %107 : vector<16x128xi1>, vector<16x128xf32>
    %c0_52 = arith.constant 0 : index
    %c2_53 = arith.constant 2 : index
    %109 = vector.load %arg9[%c0_52, %c2_53] : memref<16x4xf32, #tpu.memory_space<vmem>>, vector<16x1xf32>
    %110 = arith.mulf %103, %109 : vector<16x1xf32>
    %cst_54 = arith.constant dense<0.000000e+00> : vector<16xf32>
    %111 = vector.multi_reduction <add>, %108, %cst_54 [1] : vector<16x128xf32> to vector<16xf32>
    %112 = vector.shape_cast %111 : vector<16xf32> to vector<16x1xf32>
    %113 = arith.addf %110, %112 : vector<16x1xf32>
    %c0_55 = arith.constant 0 : index
    %c2_56 = arith.constant 2 : index
    %114 = vector.load %arg9[%c0_55, %c2_56] : memref<16x4xf32, #tpu.memory_space<vmem>>, vector<16x1xf32>
    tpu.vector_store %arg9[%c0_55, %c2_56], %113 {strides = array<i32>} : memref<16x4xf32, #tpu.memory_space<vmem>>, vector<16x1xf32>,
    %c0_57 = arith.constant 0 : index
    %c128 = arith.constant 128 : index
    %115 = vector.load %arg10[%c0_57, %c128] : memref<16x256xf32, #tpu.memory_space<vmem>>, vector<16x64xf32>
    %116 = vector.broadcast %103 : vector<16x1xf32> to vector<16x64xf32>
    %117 = arith.mulf %116, %115 : vector<16x64xf32>
    %c0_58 = arith.constant 0 : index
    %c128_59 = arith.constant 128 : index
    %118 = vector.load %arg2[%c0_58, %c128_59] : memref<128x256xf32, #tpu.memory_space<vmem>>, vector<128x64xf32>
    %cst_60 = arith.constant dense<0.000000e+00> : vector<16x64xf32>
    %119 = tpu.matmul %108, %118, %cst_60 {dimension_numbers = #tpu.dot_dimension_numbers<[1], [0], [0], [1], [0, 0, 1, 1], [], []>} : vector<16x128xf32>, vector<128x64xf32>, vector<16x64xf32> -> vector<16x64xf32>
    %120 = arith.addf %117, %119 : vector<16x64xf32>
    %c0_61 = arith.constant 0 : index
    %c128_62 = arith.constant 128 : index
    %121 = vector.load %arg10[%c0_61, %c128_62] : memref<16x256xf32, #tpu.memory_space<vmem>>, vector<16x64xf32>
    tpu.vector_store %arg10[%c0_61, %c128_62], %120 {strides = array<i32>} : memref<16x256xf32, #tpu.memory_space<vmem>>, vector<16x64xf32>,
    %c0_63 = arith.constant 0 : index
    %c2_64 = arith.constant 2 : index
    %122 = vector.load %arg8[%c0_63, %c2_64] : memref<16x4xf32, #tpu.memory_space<vmem>>, vector<16x1xf32>
    tpu.vector_store %arg8[%c0_63, %c2_64], %101 {strides = array<i32>} : memref<16x4xf32, #tpu.memory_space<vmem>>, vector<16x1xf32>,
    %123 = vector.extract_strided_slice %11 {offsets = [0, 3], sizes = [16, 1], strides = [1, 1]} : vector<16x4xf32> to vector<16x1xf32>
    %124 = vector.extract_strided_slice %10 {offsets = [3, 0], sizes = [1, 128], strides = [1, 1]} : vector<4x128xf32> to vector<1x128xf32>
    %125 = vector.broadcast %123 : vector<16x1xf32> to vector<16x128xf32>
    %126 = vector.broadcast %124 : vector<1x128xf32> to vector<16x128xf32>
    %127 = arith.addf %125, %126 : vector<16x128xf32>
    %cst_65 = arith.constant 0.000000e+00 : f32
    %128 = vector.broadcast %cst_65 : f32 to vector<16x128xf32>
    %129 = arith.cmpf oge, %127, %128 : vector<16x128xf32>
    %cst_66 = arith.constant 2.000000e-01 : f32
    %130 = vector.broadcast %cst_66 : f32 to vector<16x128xf32>
    %131 = arith.mulf %130, %127 : vector<16x128xf32>
    %132 = arith.select %129, %127, %131 : vector<16x128xi1>, vector<16x128xf32>
    %cst_67 = arith.constant -1.000000e+30 : f32
    %133 = vector.broadcast %cst_67 : f32 to vector<16x128xf32>
    %134 = arith.select %9, %132, %133 : vector<16x128xi1>, vector<16x128xf32>
    %c0_68 = arith.constant 0 : index
    %c3 = arith.constant 3 : index
    %135 = vector.load %arg8[%c0_68, %c3] : memref<16x4xf32, #tpu.memory_space<vmem>>, vector<16x1xf32>
    %cst_69 = arith.constant dense<0xFF800000> : vector<16xf32>
    %136 = vector.multi_reduction <maximumf>, %134, %cst_69 [1] : vector<16x128xf32> to vector<16xf32>
    %137 = vector.shape_cast %136 : vector<16xf32> to vector<16x1xf32>
    %138 = arith.maximumf %135, %137 : vector<16x1xf32>
    %139 = arith.subf %135, %138 : vector<16x1xf32>
    %140 = math.exp %139 : vector<16x1xf32>
    %141 = vector.broadcast %138 : vector<16x1xf32> to vector<16x128xf32>
    %142 = arith.subf %134, %141 : vector<16x128xf32>
    %143 = math.exp %142 : vector<16x128xf32>
    %cst_70 = arith.constant 0.000000e+00 : f32
    %144 = vector.broadcast %cst_70 : f32 to vector<16x128xf32>
    %145 = arith.select %9, %143, %144 : vector<16x128xi1>, vector<16x128xf32>
    %c0_71 = arith.constant 0 : index
    %c3_72 = arith.constant 3 : index
    %146 = vector.load %arg9[%c0_71, %c3_72] : memref<16x4xf32, #tpu.memory_space<vmem>>, vector<16x1xf32>
    %147 = arith.mulf %140, %146 : vector<16x1xf32>
    %cst_73 = arith.constant dense<0.000000e+00> : vector<16xf32>
    %148 = vector.multi_reduction <add>, %145, %cst_73 [1] : vector<16x128xf32> to vector<16xf32>
    %149 = vector.shape_cast %148 : vector<16xf32> to vector<16x1xf32>
    %150 = arith.addf %147, %149 : vector<16x1xf32>
    %c0_74 = arith.constant 0 : index
    %c3_75 = arith.constant 3 : index
    %151 = vector.load %arg9[%c0_74, %c3_75] : memref<16x4xf32, #tpu.memory_space<vmem>>, vector<16x1xf32>
    tpu.vector_store %arg9[%c0_74, %c3_75], %150 {strides = array<i32>} : memref<16x4xf32, #tpu.memory_space<vmem>>, vector<16x1xf32>,
    %c0_76 = arith.constant 0 : index
    %c192 = arith.constant 192 : index
    %152 = vector.load %arg10[%c0_76, %c192] : memref<16x256xf32, #tpu.memory_space<vmem>>, vector<16x64xf32>
    %153 = vector.broadcast %140 : vector<16x1xf32> to vector<16x64xf32>
    %154 = arith.mulf %153, %152 : vector<16x64xf32>
    %c0_77 = arith.constant 0 : index
    %c192_78 = arith.constant 192 : index
    %155 = vector.load %arg2[%c0_77, %c192_78] : memref<128x256xf32, #tpu.memory_space<vmem>>, vector<128x64xf32>
    %cst_79 = arith.constant dense<0.000000e+00> : vector<16x64xf32>
    %156 = tpu.matmul %145, %155, %cst_79 {dimension_numbers = #tpu.dot_dimension_numbers<[1], [0], [0], [1], [0, 0, 1, 1], [], []>} : vector<16x128xf32>, vector<128x64xf32>, vector<16x64xf32> -> vector<16x64xf32>
    %157 = arith.addf %154, %156 : vector<16x64xf32>
    %c0_80 = arith.constant 0 : index
    %c192_81 = arith.constant 192 : index
    %158 = vector.load %arg10[%c0_80, %c192_81] : memref<16x256xf32, #tpu.memory_space<vmem>>, vector<16x64xf32>
    tpu.vector_store %arg10[%c0_80, %c192_81], %157 {strides = array<i32>} : memref<16x256xf32, #tpu.memory_space<vmem>>, vector<16x64xf32>,
    %c0_82 = arith.constant 0 : index
    %c3_83 = arith.constant 3 : index
    %159 = vector.load %arg8[%c0_82, %c3_83] : memref<16x4xf32, #tpu.memory_space<vmem>>, vector<16x1xf32>
    tpu.vector_store %arg8[%c0_82, %c3_83], %138 {strides = array<i32>} : memref<16x4xf32, #tpu.memory_space<vmem>>, vector<16x1xf32>,
    %c0_i32_84 = arith.constant 0 : i32
    %160 = arith.cmpi eq, %arg1, %c0_i32_84 : i32
    %161 = arith.extui %160 : i1 to i32
    %c0_i32_85 = arith.constant 0 : i32
    %162 = arith.cmpi ne, %161, %c0_i32_85 : i32
    scf.if %162 {
      %c0_86 = arith.constant 0 : index
      %c0_87 = arith.constant 0 : index
      %163 = vector.load %arg9[%c0_86, %c0_87] : memref<16x4xf32, #tpu.memory_space<vmem>>, vector<16x1xf32>
      %cst_88 = arith.constant 9.99999968E-21 : f32
      %164 = vector.broadcast %cst_88 : f32 to vector<16x1xf32>
      %165 = arith.maximumf %163, %164 : vector<16x1xf32>
      %c0_89 = arith.constant 0 : index
      %c0_90 = arith.constant 0 : index
      %166 = vector.load %arg10[%c0_89, %c0_90] : memref<16x256xf32, #tpu.memory_space<vmem>>, vector<16x64xf32>
      %167 = vector.broadcast %165 : vector<16x1xf32> to vector<16x64xf32>
      %168 = arith.divf %166, %167 : vector<16x64xf32>
      %c0_91 = arith.constant 0 : index
      %c1_92 = arith.constant 1 : index
      %169 = vector.load %arg9[%c0_91, %c1_92] : memref<16x4xf32, #tpu.memory_space<vmem>>, vector<16x1xf32>
      %cst_93 = arith.constant 9.99999968E-21 : f32
      %170 = vector.broadcast %cst_93 : f32 to vector<16x1xf32>
      %171 = arith.maximumf %169, %170 : vector<16x1xf32>
      %c0_94 = arith.constant 0 : index
      %c64_95 = arith.constant 64 : index
      %172 = vector.load %arg10[%c0_94, %c64_95] : memref<16x256xf32, #tpu.memory_space<vmem>>, vector<16x64xf32>
      %173 = vector.broadcast %171 : vector<16x1xf32> to vector<16x64xf32>
      %174 = arith.divf %172, %173 : vector<16x64xf32>
      %c0_96 = arith.constant 0 : index
      %c2_97 = arith.constant 2 : index
      %175 = vector.load %arg9[%c0_96, %c2_97] : memref<16x4xf32, #tpu.memory_space<vmem>>, vector<16x1xf32>
      %cst_98 = arith.constant 9.99999968E-21 : f32
      %176 = vector.broadcast %cst_98 : f32 to vector<16x1xf32>
      %177 = arith.maximumf %175, %176 : vector<16x1xf32>
      %c0_99 = arith.constant 0 : index
      %c128_100 = arith.constant 128 : index
      %178 = vector.load %arg10[%c0_99, %c128_100] : memref<16x256xf32, #tpu.memory_space<vmem>>, vector<16x64xf32>
      %179 = vector.broadcast %177 : vector<16x1xf32> to vector<16x64xf32>
      %180 = arith.divf %178, %179 : vector<16x64xf32>
      %c0_101 = arith.constant 0 : index
      %c3_102 = arith.constant 3 : index
      %181 = vector.load %arg9[%c0_101, %c3_102] : memref<16x4xf32, #tpu.memory_space<vmem>>, vector<16x1xf32>
      %cst_103 = arith.constant 9.99999968E-21 : f32
      %182 = vector.broadcast %cst_103 : f32 to vector<16x1xf32>
      %183 = arith.maximumf %181, %182 : vector<16x1xf32>
      %c0_104 = arith.constant 0 : index
      %c192_105 = arith.constant 192 : index
      %184 = vector.load %arg10[%c0_104, %c192_105] : memref<16x256xf32, #tpu.memory_space<vmem>>, vector<16x64xf32>
      %185 = vector.broadcast %183 : vector<16x1xf32> to vector<16x64xf32>
      %186 = arith.divf %184, %185 : vector<16x64xf32>
      %187 = tpu.concatenate %168, %174, %180, %186 in 1 : vector<16x64xf32>, vector<16x64xf32>, vector<16x64xf32>, vector<16x64xf32> -> vector<16x256xf32>
      %c0_106 = arith.constant 0 : index
      %c0_107 = arith.constant 0 : index
      %188 = vector.load %arg6[%c0_106, %c0_107] : memref<1x256xf32, #tpu.memory_space<vmem>>, vector<1x256xf32>
      %189 = vector.broadcast %188 : vector<1x256xf32> to vector<16x256xf32>
      %190 = arith.addf %187, %189 : vector<16x256xf32>
      %cst_108 = arith.constant 0.000000e+00 : f32
      %191 = vector.broadcast %cst_108 : f32 to vector<16x256xf32>
      %192 = arith.cmpf ogt, %190, %191 : vector<16x256xf32>
      %193 = math.exp %190 : vector<16x256xf32>
      %cst_109 = arith.constant 1.000000e+00 : f32
      %194 = vector.broadcast %cst_109 : f32 to vector<16x256xf32>
      %195 = arith.subf %193, %194 : vector<16x256xf32>
      %196 = arith.select %192, %190, %195 : vector<16x256xi1>, vector<16x256xf32>
      %c0_110 = arith.constant 0 : index
      %c0_111 = arith.constant 0 : index
      %197 = vector.load %arg7[%c0_110, %c0_111] : memref<16x256xf32, #tpu.memory_space<vmem>>, vector<16x256xf32>
      tpu.vector_store %arg7[%c0_110, %c0_111], %196 {strides = array<i32>} : memref<16x256xf32, #tpu.memory_space<vmem>>, vector<16x256xf32>,
    } else {
    }
    return
  }
  func.func @transform_0(%arg0: i32, %arg1: i32) -> (i32, i32) {
    %c0_i32 = arith.constant 0 : i32
    %c0_i32_0 = arith.constant 0 : i32
    return %arg1, %c0_i32 : i32, i32
  }
  func.func @transform_1(%arg0: i32, %arg1: i32) -> (i32, i32) {
    %c0_i32 = arith.constant 0 : i32
    %c0_i32_0 = arith.constant 0 : i32
    return %c0_i32, %arg1 : i32, i32
  }
  func.func @transform_2(%arg0: i32, %arg1: i32) -> (i32, i32) {
    %c0_i32 = arith.constant 0 : i32
    %c0_i32_0 = arith.constant 0 : i32
    return %arg0, %c0_i32 : i32, i32
  }
  func.func @transform_3(%arg0: i32, %arg1: i32) -> (i32, i32) {
    %c0_i32 = arith.constant 0 : i32
    %c0_i32_0 = arith.constant 0 : i32
    return %c0_i32, %arg1 : i32, i32
  }
  func.func @transform_4(%arg0: i32, %arg1: i32) -> (i32, i32) {
    %c0_i32 = arith.constant 0 : i32
    %c0_i32_0 = arith.constant 0 : i32
    %c0_i32_1 = arith.constant 0 : i32
    return %c0_i32, %c0_i32_0 : i32, i32
  }
  func.func @transform_5(%arg0: i32, %arg1: i32) -> (i32, i32) {
    %c0_i32 = arith.constant 0 : i32
    %c0_i32_0 = arith.constant 0 : i32
    return %arg0, %c0_i32 : i32, i32
  }
}

</mosaic_0001>

<llo_original>
// kernel: tpu_custom_call.1
$region0: #{tpu_custom_call.1}
  #allocation0 [shape = 'u32[]', space=smem, size = 0x4, offset = 0x4, fixed_abs, tag = 'smem constant byte address 0x4 - core index']
  #allocation1 [shape = 'u32[144,128]{1,0:T(1,128)}', space=vmem, size = 0x12000, scoped, tag = 'internal scratch']
  #allocation2 [shape = 'f32[16,4]{1,0:T(8,128)}', space=vmem, size = 0x2000, scoped, tag = 'scratch operand']
  #allocation3 [shape = 'f32[16,4]{1,0:T(8,128)}', space=vmem, size = 0x2000, scoped, tag = 'scratch operand']
  #allocation4 [shape = 'f32[16,256]{1,0:T(8,128)}', space=vmem, size = 0x4000, scoped, tag = 'scratch operand']
  %s0 = inlined_call_operand.hbm [shape: f32[128,256], index: 0, kind: input, shape index: {}]
  %s1 = inlined_call_operand.vmem [shape: f32[4,128], index: 1, kind: input, shape index: {}]
  %s2 = inlined_call_operand.vmem [shape: f32[16,4], index: 2, kind: input, shape index: {}]
  %s3 = inlined_call_operand.vmem [shape: s32[1,128], index: 3, kind: input, shape index: {}]
  %s4 = inlined_call_operand.vmem [shape: f32[1,256], index: 4, kind: input, shape index: {}]
  %s5 = inlined_call_operand.hbm [shape: f32[16,256], index: 5, kind: output, shape index: {}]
  %s6 = sld [smem:[#allocation0]]
  $region42: #{tpu_custom_call.1} parent=0
    _
  %s8 = ssub.s32 1, %s6
  %s9 = scalar_select 0, %s8, %s6
  $region1: #{tpu_custom_call.1} parent=0
    #allocation5 [shape = 'u8[131072]{0}', space=vmem, size = 0x20000, scoped, tag = 'input window, operand 0, single buffered']
    #allocation6 [shape = 's32[1]{0}', space=sflag, size = 0x4, scoped, tag = 'scoped memory for tpu_custom_call.1']
    #allocation7 [shape = 's32[1]{0}', space=sflag, size = 0x4, scoped, tag = 'scoped memory for tpu_custom_call.1']
    #allocation8 [shape = 'u8[16384]{0}', space=vmem, size = 0x4000, scoped, tag = 'output window, operand 0, single buffered']
    %10 = vsyncpa [#allocation6], 0
    %11 = vsyncpa [#allocation7], 0
    // Predicated region
    $region2: #{tpu_custom_call.1} parent=1 // pred_check
      _
    $region3: #{tpu_custom_call.1} parent=1 // pred_check_branch
      %13 = sbr.rel (0) target = $region5
    $region4: #{tpu_custom_call.1} parent=1 // pred_region
      %s15 = ssub.s32 4096, 4096
      %16 = vsyncadd [#allocation6], %s15
      %s17 = sshll.u32 [#allocation5], 4
      %s18 = int_to_ptr.vmem [resolvable:$true] %s17
      %23 = dma.hbm_to_vmem [thread:$0]  %s0, 4096, %s18, [#allocation6], 256, 256, 16
    $region5: #{tpu_custom_call.1} parent=1 // pred_fallthru
      _
    // Predicated region
    $region6: #{tpu_custom_call.1} parent=1 // pred_check
      _
    $region7: #{tpu_custom_call.1} parent=1 // pred_check_branch
      %25 = sbr.rel (0) target = $region9
    $region8: #{tpu_custom_call.1} parent=1 // pred_region
      _
    $region9: #{tpu_custom_call.1} parent=1 // pred_fallthru
      _
    // Predicated region
    $region10: #{tpu_custom_call.1} parent=1 // pred_check
      _
    $region11: #{tpu_custom_call.1} parent=1 // pred_check_branch
      %27 = sbr.rel (0) target = $region13
    $region12: #{tpu_custom_call.1} parent=1 // pred_region
      _
    $region13: #{tpu_custom_call.1} parent=1 // pred_fallthru
      _
    // Predicated region
    $region14: #{tpu_custom_call.1} parent=1 // pred_check
      _
    $region15: #{tpu_custom_call.1} parent=1 // pred_check_branch
      %29 = sbr.rel (0) target = $region17
    $region16: #{tpu_custom_call.1} parent=1 // pred_region
      _
    $region17: #{tpu_custom_call.1} parent=1 // pred_fallthru
      _
    // Predicated region
    $region18: #{tpu_custom_call.1} parent=1 // pred_check
      _
    $region19: #{tpu_custom_call.1} parent=1 // pred_check_branch
      %31 = sbr.rel (0) target = $region21
    $region20: #{tpu_custom_call.1} parent=1 // pred_region
      _
    $region21: #{tpu_custom_call.1} parent=1 // pred_fallthru
      _
    // Predicated region
    $region22: #{tpu_custom_call.1} parent=1 // pred_check
      _
    $region23: #{tpu_custom_call.1} parent=1 // pred_check_branch
      %33 = sbr.rel (0) target = $region25
    $region24: #{tpu_custom_call.1} parent=1 // pred_region
      %34 = dma.done [#allocation6], 4096
    $region25: #{tpu_custom_call.1} parent=1 // pred_fallthru
      _
    %s35 = smul.u32 0, 16
    %p36 = scmp.eq.s32.totalorder 0, 0
    // Predicated region
    $region26: #{tpu_custom_call.1} parent=1 // pred_check
      %p37 = pneg %p36
    $region27: #{tpu_custom_call.1} parent=1 // pred_check_branch
      %39 = sbr.rel (%p37) target = $region29
    $region28: #{tpu_custom_call.1} parent=1 // pred_region
      %vm40 = vcmask 31744
      %41 = vst.msk [vmem:[#allocation2] sm:$0xff] %vm40, -1e+30
      %42 = vst.msk [vmem:[#allocation2 + $0x8] sm:$0xff] %vm40, -1e+30
      %43 = vst.msk [vmem:[#allocation3] sm:$0xff] %vm40, 0.0
      %44 = vst.msk [vmem:[#allocation3 + $0x8] sm:$0xff] %vm40, 0.0
      %45 = vst [vmem:[#allocation4] sm:$0xff] 0.0
      %46 = vst [vmem:[#allocation4 + $0x8] sm:$0xff] 0.0
      %47 = vst [vmem:[#allocation4 + $0x10] sm:$0xff] 0.0
      %48 = vst [vmem:[#allocation4 + $0x18] sm:$0xff] 0.0
    $region29: #{tpu_custom_call.1} parent=1 // pred_fallthru
      _
    %v49 = vld [vmem:[%s3] sm:$0x1]
    %v50 = vlaneseq
    %v51 = vshrl.u32 %v50, 7
    %v52 = vadd.s32 %v51, 8
    %v53 = vstv %s35
    %v54 = vadd.s32 %v51, %v53
    %v55 = vadd.s32 %v52, %v53
    %v56 = vlaneseq
    %v57 = vshrl.u32 %v56, 7
    %v58 = vsub.s32 0, %v57
    %v59 = vrot.slane %v49, %v58
    %vm60 = vcmp.eq.s32.totalorder %v54, %v59
    %vm61 = vcmp.eq.s32.totalorder %v55, %v59
    %v62 = vld [vmem:[%s1] sm:$0xf]
    %v63 = vld [vmem:[%s2] sm:$0xff]
    %v64 = vld [vmem:[%s2 + $0x8] sm:$0xff]
    %66 = vset.pattern.permute.xlu0 0
    %67 = vperm.xlu0 %66, %v63
    %v68 = vpop.permute.xlu0 %67
    %71 = vset.pattern.permute.xlu0 0
    %72 = vperm.xlu0 %71, %v64
    %v73 = vpop.permute.xlu0 %72
    %v75 = vlaneseq
    %v76 = vshrl.u32 %v75, 7
    %v77 = vsub.s32 0, %v76
    %v78 = vrot.slane %v62, %v77
    %v79 = vadd.f32 %v68, %v78
    %v80 = vadd.f32 %v73, %v78
    %vm81 = vcmp.ge.f32.partialorder %v79, 0.0
    %vm82 = vcmp.ge.f32.partialorder %v80, 0.0
    %v83 = vmul.f32 %v79, 0.2
    %v84 = vmul.f32 %v80, 0.2
    %v85 = vsel %vm81, %v79, %v83
    %v86 = vsel %vm82, %v80, %v84
    %v87 = vsel %vm60, %v85, -1e+30
    %v88 = vsel %vm61, %v86, -1e+30
    %v89 = vld [vmem:[#allocation2] sm:$0xff]
    %v90 = vld [vmem:[#allocation2 + $0x8] sm:$0xff]
    %91 = vmax.xlane.f32.xlu0 %v87
    %v92 = vpop.xlane.xlu0 %91
    %93 = vmax.xlane.f32.xlu0 %v88
    %v94 = vpop.xlane.xlu0 %93
    %v95 = vmax.f32 %v89, %v92
    %v96 = vmax.f32 %v90, %v94
    %v97 = vsub.f32 %v89, %v95
    %v98 = vsub.f32 %v90, %v96
    %v99 = vmul.f32 %v97, 1.442695
    %v100 = vpow.pop %v99
    %v101 = vmul.f32 %v98, 1.442695
    %v102 = vpow.pop %v101
    %104 = vset.pattern.permute.xlu0 0
    %105 = vperm.xlu0 %104, %v95
    %v106 = vpop.permute.xlu0 %105
    %109 = vset.pattern.permute.xlu0 0
    %110 = vperm.xlu0 %109, %v96
    %v111 = vpop.permute.xlu0 %110
    %v113 = vsub.f32 %v87, %v106
    %v114 = vsub.f32 %v88, %v111
    %v115 = vmul.f32 %v113, 1.442695
    %v116 = vpow.pop %v115
    %v117 = vmul.f32 %v114, 1.442695
    %v118 = vpow.pop %v117
    %v119 = vsel %vm60, %v116, 0.0
    %v120 = vsel %vm61, %v118, 0.0
    %v121 = vld [vmem:[#allocation3] sm:$0xff]
    %v122 = vld [vmem:[#allocation3 + $0x8] sm:$0xff]
    %v123 = vmul.f32 %v100, %v121
    %v124 = vmul.f32 %v102, %v122
    %125 = vadd.xlane.f32.xlu0 %v119
    %v126 = vpop.xlane.xlu0 %125
    %127 = vadd.xlane.f32.xlu0 %v120
    %v128 = vpop.xlane.xlu0 %127
    %v129 = vadd.f32 %v123, %v126
    %v130 = vadd.f32 %v124, %v128
    %vm131 = vcmask 7168
    %132 = vst.msk [vmem:[#allocation3] sm:$0xff] %vm131, %v129
    %133 = vst.msk [vmem:[#allocation3 + $0x8] sm:$0xff] %vm131, %v130
    %v134 = vld [vmem:[#allocation4] sm:$0xff]
    %v135 = vld [vmem:[#allocation4 + $0x10] sm:$0xff]
    %137 = vset.pattern.permute.xlu0 0
    %138 = vperm.xlu0 %137, %v100
    %v139 = vpop.permute.xlu0 %138
    %142 = vset.pattern.permute.xlu0 0
    %143 = vperm.xlu0 %142, %v102
    %v144 = vpop.permute.xlu0 %143
    %v146 = vmul.f32 %v139, %v134
    %v147 = vmul.f32 %v144, %v135
    %v148 = vld [vmem:[#allocation5] sm:$0xff]
    %v149 = vld [vmem:[#allocation5 + $0x10] sm:$0xff]
    %v150 = vld [vmem:[#allocation5 + $0x20] sm:$0xff]
    %v151 = vld [vmem:[#allocation5 + $0x30] sm:$0xff]
    %v152 = vld [vmem:[#allocation5 + $0x40] sm:$0xff]
    %v153 = vld [vmem:[#allocation5 + $0x50] sm:$0xff]
    %v154 = vld [vmem:[#allocation5 + $0x60] sm:$0xff]
    %v155 = vld [vmem:[#allocation5 + $0x70] sm:$0xff]
    %v156 = vld [vmem:[#allocation5 + $0x80] sm:$0xff]
    %v157 = vld [vmem:[#allocation5 + $0x90] sm:$0xff]
    %v158 = vld [vmem:[#allocation5 + $0xa0] sm:$0xff]
    %v159 = vld [vmem:[#allocation5 + $0xb0] sm:$0xff]
    %v160 = vld [vmem:[#allocation5 + $0xc0] sm:$0xff]
    %v161 = vld [vmem:[#allocation5 + $0xd0] sm:$0xff]
    %v162 = vld [vmem:[#allocation5 + $0xe0] sm:$0xff]
    %v163 = vld [vmem:[#allocation5 + $0xf0] sm:$0xff]
    %164 = vmatprep.subr.mxu0 0.0
    %165 = vmatpush1.msra.mxu0 %v163
    %166 = vmatprep.subr.mxu0 0.0
    %167 = vmatpush1.msra.mxu0 %v162
    %168 = vmatprep.subr.mxu0 0.0
    %169 = vmatpush1.msra.mxu0 %v161
    %170 = vmatprep.subr.mxu0 0.0
    %171 = vmatpush1.msra.mxu0 %v160
    %172 = vmatprep.subr.mxu0 0.0
    %173 = vmatpush1.msra.mxu0 %v159
    %174 = vmatprep.subr.mxu0 0.0
    %175 = vmatpush1.msra.mxu0 %v158
    %176 = vmatprep.subr.mxu0 0.0
    %177 = vmatpush1.msra.mxu0 %v157
    %178 = vmatprep.subr.mxu0 0.0
    %179 = vmatpush1.msra.mxu0 %v156
    %180 = vmatprep.subr.mxu0 0.0
    %181 = vmatpush1.msra.mxu0 %v155
    %182 = vmatprep.subr.mxu0 0.0
    %183 = vmatpush1.msra.mxu0 %v154
    %184 = vmatprep.subr.mxu0 0.0
    %185 = vmatpush1.msra.mxu0 %v153
    %186 = vmatprep.subr.mxu0 0.0
    %187 = vmatpush1.msra.mxu0 %v152
    %188 = vmatprep.subr.mxu0 0.0
    %189 = vmatpush1.msra.mxu0 %v151
    %190 = vmatprep.subr.mxu0 0.0
    %191 = vmatpush1.msra.mxu0 %v150
    %192 = vmatprep.subr.mxu0 0.0
    %193 = vmatpush1.msra.mxu0 %v149
    %194 = vmatprep.subr.mxu0 0.0
    %195 = vmatpush1.msra.mxu0 %v148
    %196 = vmatprep.subr.mxu0 0.0
    %197 = vmatpush2.msra.mxu0 0.0
    %198 = vmatprep.subr.mxu0 0.0
    %199 = vmatpush2.msra.mxu0 0.0
    %200 = vmatprep.subr.mxu0 0.0
    %201 = vmatpush2.msra.mxu0 0.0
    %202 = vmatprep.subr.mxu0 0.0
    %203 = vmatpush2.msra.mxu0 0.0
    %204 = vmatprep.subr.mxu0 0.0
    %205 = vmatpush2.msra.mxu0 0.0
    %206 = vmatprep.subr.mxu0 0.0
    %207 = vmatpush2.msra.mxu0 0.0
    %208 = vmatprep.subr.mxu0 0.0
    %209 = vmatpush2.msra.mxu0 0.0
    %210 = vmatprep.subr.mxu0 0.0
    %211 = vmatpush2.msra.mxu0 0.0
    %212 = vmatprep.subr.mxu0 0.0
    %213 = vmatpush2.msra.mxu0 0.0
    %214 = vmatprep.subr.mxu0 0.0
    %215 = vmatpush2.msra.mxu0 0.0
    %216 = vmatprep.subr.mxu0 0.0
    %217 = vmatpush2.msra.mxu0 0.0
    %218 = vmatprep.subr.mxu0 0.0
    %219 = vmatpush2.msra.mxu0 0.0
    %220 = vmatprep.subr.mxu0 0.0
    %221 = vmatpush2.msra.mxu0 0.0
    %222 = vmatprep.subr.mxu0 0.0
    %223 = vmatpush2.msra.mxu0 0.0
    %224 = vmatprep.subr.mxu0 0.0
    %225 = vmatpush2.msra.mxu0 0.0
    %226 = vmatprep.subr.mxu0 0.0
    %227 = vmatpush2.msra.mxu0 0.0
    %228 = vmatprep.mubr.f32.mxu0 0.0
    %229 = vmatmul.mubr.f32.gmra.mxu0 %v119
    %v230 = vpop.f32.mrf.mxu0
    %v231 = vadd.f32 0.0, %v230
    %v232 = vpop.f32.mrf.mxu0
    %233 = vmatprep.mubr.f32.mxu0 0.0
    %234 = vmatmul.mubr.f32.gmra.mxu0 %v120
    %v235 = vpop.f32.mrf.mxu0
    %v236 = vadd.f32 0.0, %v235
    %v237 = vpop.f32.mrf.mxu0
    %238 = vdwg.mxu0
    %v239 = vadd.f32 %v146, %v231
    %v240 = vadd.f32 %v147, %v236
    %vm241 = vcmask 523264
    %242 = vst.msk [vmem:[#allocation4] sm:$0xff] %vm241, %v239
    %243 = vst.msk [vmem:[#allocation4 + $0x10] sm:$0xff] %vm241, %v240
    %244 = vst.msk [vmem:[#allocation2] sm:$0xff] %vm131, %v95
    %245 = vst.msk [vmem:[#allocation2 + $0x8] sm:$0xff] %vm131, %v96
    %246 = vset.pattern.permute.xlu0 1
    %247 = vperm.xlu0 %246, %v63
    %v248 = vpop.permute.xlu0 %247
    %250 = vset.pattern.permute.xlu0 1
    %251 = vperm.xlu0 %250, %v64
    %v252 = vpop.permute.xlu0 %251
    %v254 = vlaneseq
    %v255 = vshrl.u32 %v254, 7
    %v256 = vsub.s32 1, %v255
    %v257 = vrot.slane %v62, %v256
    %v258 = vadd.f32 %v248, %v257
    %v259 = vadd.f32 %v252, %v257
    %vm260 = vcmp.ge.f32.partialorder %v258, 0.0
    %vm261 = vcmp.ge.f32.partialorder %v259, 0.0
    %v262 = vmul.f32 %v258, 0.2
    %v263 = vmul.f32 %v259, 0.2
    %v264 = vsel %vm260, %v258, %v262
    %v265 = vsel %vm261, %v259, %v263
    %v266 = vsel %vm60, %v264, -1e+30
    %v267 = vsel %vm61, %v265, -1e+30
    %v268 = vld [vmem:[#allocation2] sm:$0xff]
    %v269 = vld [vmem:[#allocation2 + $0x8] sm:$0xff]
    %270 = vmax.xlane.f32.xlu0 %v266
    %v271 = vpop.xlane.xlu0 %270
    %272 = vmax.xlane.f32.xlu0 %v267
    %v273 = vpop.xlane.xlu0 %272
    %v274 = vmax.f32 %v268, %v271
    %v275 = vmax.f32 %v269, %v273
    %v276 = vsub.f32 %v268, %v274
    %v277 = vsub.f32 %v269, %v275
    %v278 = vmul.f32 %v276, 1.442695
    %v279 = vpow.pop %v278
    %v280 = vmul.f32 %v277, 1.442695
    %v281 = vpow.pop %v280
    %283 = vset.pattern.permute.xlu0 1
    %284 = vperm.xlu0 %283, %v274
    %v285 = vpop.permute.xlu0 %284
    %288 = vset.pattern.permute.xlu0 1
    %289 = vperm.xlu0 %288, %v275
    %v290 = vpop.permute.xlu0 %289
    %v292 = vsub.f32 %v266, %v285
    %v293 = vsub.f32 %v267, %v290
    %v294 = vmul.f32 %v292, 1.442695
    %v295 = vpow.pop %v294
    %v296 = vmul.f32 %v293, 1.442695
    %v297 = vpow.pop %v296
    %v298 = vsel %vm60, %v295, 0.0
    %v299 = vsel %vm61, %v297, 0.0
    %v300 = vld [vmem:[#allocation3] sm:$0xff]
    %v301 = vld [vmem:[#allocation3 + $0x8] sm:$0xff]
    %v302 = vmul.f32 %v279, %v300
    %v303 = vmul.f32 %v281, %v301
    %304 = vadd.xlane.f32.xlu0 %v298
    %v305 = vpop.xlane.xlu0 %304
    %306 = vadd.xlane.f32.xlu0 %v299
    %v307 = vpop.xlane.xlu0 %306
    %v308 = vadd.f32 %v302, %v305
    %v309 = vadd.f32 %v303, %v307
    %vm310 = vcmask 15368
    %311 = vst.msk [vmem:[#allocation3] sm:$0xff] %vm310, %v308
    %312 = vst.msk [vmem:[#allocation3 + $0x8] sm:$0xff] %vm310, %v309
    %v313 = vld [vmem:[#allocation4] sm:$0xff]
    %v314 = vld [vmem:[#allocation4 + $0x10] sm:$0xff]
    %316 = vset.pattern.permute.xlu0 1
    %317 = vperm.xlu0 %316, %v279
    %v318 = vpop.permute.xlu0 %317
    %321 = vset.pattern.permute.xlu0 1
    %322 = vperm.xlu0 %321, %v281
    %v323 = vpop.permute.xlu0 %322
    %v325 = vmul.f32 %v318, %v313
    %v326 = vmul.f32 %v323, %v314
    %v327 = vld [vmem:[#allocation5] sm:$0xff]
    %v328 = vld [vmem:[#allocation5 + $0x10] sm:$0xff]
    %v329 = vld [vmem:[#allocation5 + $0x20] sm:$0xff]
    %v330 = vld [vmem:[#allocation5 + $0x30] sm:$0xff]
    %v331 = vld [vmem:[#allocation5 + $0x40] sm:$0xff]
    %v332 = vld [vmem:[#allocation5 + $0x50] sm:$0xff]
    %v333 = vld [vmem:[#allocation5 + $0x60] sm:$0xff]
    %v334 = vld [vmem:[#allocation5 + $0x70] sm:$0xff]
    %v335 = vld [vmem:[#allocation5 + $0x80] sm:$0xff]
    %v336 = vld [vmem:[#allocation5 + $0x90] sm:$0xff]
    %v337 = vld [vmem:[#allocation5 + $0xa0] sm:$0xff]
    %v338 = vld [vmem:[#allocation5 + $0xb0] sm:$0xff]
    %v339 = vld [vmem:[#allocation5 + $0xc0] sm:$0xff]
    %v340 = vld [vmem:[#allocation5 + $0xd0] sm:$0xff]
    %v341 = vld [vmem:[#allocation5 + $0xe0] sm:$0xff]
    %v342 = vld [vmem:[#allocation5 + $0xf0] sm:$0xff]
    %359 = vrot.lane.b32.xlu0 %v327, 64
    %v360 = vpop.permute.xlu0 %359
    %361 = vrot.lane.b32.xlu0 %v328, 64
    %v362 = vpop.permute.xlu0 %361
    %363 = vrot.lane.b32.xlu0 %v329, 64
    %v364 = vpop.permute.xlu0 %363
    %365 = vrot.lane.b32.xlu0 %v330, 64
    %v366 = vpop.permute.xlu0 %365
    %367 = vrot.lane.b32.xlu0 %v331, 64
    %v368 = vpop.permute.xlu0 %367
    %369 = vrot.lane.b32.xlu0 %v332, 64
    %v370 = vpop.permute.xlu0 %369
    %371 = vrot.lane.b32.xlu0 %v333, 64
    %v372 = vpop.permute.xlu0 %371
    %373 = vrot.lane.b32.xlu0 %v334, 64
    %v374 = vpop.permute.xlu0 %373
    %375 = vrot.lane.b32.xlu0 %v335, 64
    %v376 = vpop.permute.xlu0 %375
    %377 = vrot.lane.b32.xlu0 %v336, 64
    %v378 = vpop.permute.xlu0 %377
    %379 = vrot.lane.b32.xlu0 %v337, 64
    %v380 = vpop.permute.xlu0 %379
    %381 = vrot.lane.b32.xlu0 %v338, 64
    %v382 = vpop.permute.xlu0 %381
    %383 = vrot.lane.b32.xlu0 %v339, 64
    %v384 = vpop.permute.xlu0 %383
    %385 = vrot.lane.b32.xlu0 %v340, 64
    %v386 = vpop.permute.xlu0 %385
    %387 = vrot.lane.b32.xlu0 %v341, 64
    %v388 = vpop.permute.xlu0 %387
    %389 = vrot.lane.b32.xlu0 %v342, 64
    %v390 = vpop.permute.xlu0 %389
    %407 = vmatprep.subr.mxu0 0.0
    %408 = vmatpush1.msra.mxu0 %v390
    %409 = vmatprep.subr.mxu0 0.0
    %410 = vmatpush1.msra.mxu0 %v388
    %411 = vmatprep.subr.mxu0 0.0
    %412 = vmatpush1.msra.mxu0 %v386
    %413 = vmatprep.subr.mxu0 0.0
    %414 = vmatpush1.msra.mxu0 %v384
    %415 = vmatprep.subr.mxu0 0.0
    %416 = vmatpush1.msra.mxu0 %v382
    %417 = vmatprep.subr.mxu0 0.0
    %418 = vmatpush1.msra.mxu0 %v380
    %419 = vmatprep.subr.mxu0 0.0
    %420 = vmatpush1.msra.mxu0 %v378
    %421 = vmatprep.subr.mxu0 0.0
    %422 = vmatpush1.msra.mxu0 %v376
    %423 = vmatprep.subr.mxu0 0.0
    %424 = vmatpush1.msra.mxu0 %v374
    %425 = vmatprep.subr.mxu0 0.0
    %426 = vmatpush1.msra.mxu0 %v372
    %427 = vmatprep.subr.mxu0 0.0
    %428 = vmatpush1.msra.mxu0 %v370
    %429 = vmatprep.subr.mxu0 0.0
    %430 = vmatpush1.msra.mxu0 %v368
    %431 = vmatprep.subr.mxu0 0.0
    %432 = vmatpush1.msra.mxu0 %v366
    %433 = vmatprep.subr.mxu0 0.0
    %434 = vmatpush1.msra.mxu0 %v364
    %435 = vmatprep.subr.mxu0 0.0
    %436 = vmatpush1.msra.mxu0 %v362
    %437 = vmatprep.subr.mxu0 0.0
    %438 = vmatpush1.msra.mxu0 %v360
    %439 = vmatprep.subr.mxu0 0.0
    %440 = vmatpush2.msra.mxu0 0.0
    %441 = vmatprep.subr.mxu0 0.0
    %442 = vmatpush2.msra.mxu0 0.0
    %443 = vmatprep.subr.mxu0 0.0
    %444 = vmatpush2.msra.mxu0 0.0
    %445 = vmatprep.subr.mxu0 0.0
    %446 = vmatpush2.msra.mxu0 0.0
    %447 = vmatprep.subr.mxu0 0.0
    %448 = vmatpush2.msra.mxu0 0.0
    %449 = vmatprep.subr.mxu0 0.0
    %450 = vmatpush2.msra.mxu0 0.0
    %451 = vmatprep.subr.mxu0 0.0
    %452 = vmatpush2.msra.mxu0 0.0
    %453 = vmatprep.subr.mxu0 0.0
    %454 = vmatpush2.msra.mxu0 0.0
    %455 = vmatprep.subr.mxu0 0.0
    %456 = vmatpush2.msra.mxu0 0.0
    %457 = vmatprep.subr.mxu0 0.0
    %458 = vmatpush2.msra.mxu0 0.0
    %459 = vmatprep.subr.mxu0 0.0
    %460 = vmatpush2.msra.mxu0 0.0
    %461 = vmatprep.subr.mxu0 0.0
    %462 = vmatpush2.msra.mxu0 0.0
    %463 = vmatprep.subr.mxu0 0.0
    %464 = vmatpush2.msra.mxu0 0.0
    %465 = vmatprep.subr.mxu0 0.0
    %466 = vmatpush2.msra.mxu0 0.0
    %467 = vmatprep.subr.mxu0 0.0
    %468 = vmatpush2.msra.mxu0 0.0
    %469 = vmatprep.subr.mxu0 0.0
    %470 = vmatpush2.msra.mxu0 0.0
    %471 = vmatprep.mubr.f32.mxu0 0.0
    %472 = vmatmul.mubr.f32.gmra.mxu0 %v298
    %v473 = vpop.f32.mrf.mxu0
    %v474 = vadd.f32 0.0, %v473
    %v475 = vpop.f32.mrf.mxu0
    %476 = vmatprep.mubr.f32.mxu0 0.0
    %477 = vmatmul.mubr.f32.gmra.mxu0 %v299
    %v478 = vpop.f32.mrf.mxu0
    %v479 = vadd.f32 0.0, %v478
    %v480 = vpop.f32.mrf.mxu0
    %481 = vdwg.mxu0
    %484 = vrot.lane.b32.xlu0 %v474, 64
    %v485 = vpop.permute.xlu0 %484
    %486 = vrot.lane.b32.xlu0 %v479, 64
    %v487 = vpop.permute.xlu0 %486
    %v490 = vadd.f32 %v325, %v485
    %v491 = vadd.f32 %v326, %v487
    %vm492 = vcmask 1048064
    %493 = vst.msk [vmem:[#allocation4] sm:$0xff] %vm492, %v490
    %494 = vst.msk [vmem:[#allocation4 + $0x10] sm:$0xff] %vm492, %v491
    %495 = vst.msk [vmem:[#allocation2] sm:$0xff] %vm310, %v274
    %496 = vst.msk [vmem:[#allocation2 + $0x8] sm:$0xff] %vm310, %v275
    %497 = vset.pattern.permute.xlu0 2
    %498 = vperm.xlu0 %497, %v63
    %v499 = vpop.permute.xlu0 %498
    %501 = vset.pattern.permute.xlu0 2
    %502 = vperm.xlu0 %501, %v64
    %v503 = vpop.permute.xlu0 %502
    %v505 = vlaneseq
    %v506 = vshrl.u32 %v505, 7
    %v507 = vsub.s32 2, %v506
    %v508 = vrot.slane %v62, %v507
    %v509 = vadd.f32 %v499, %v508
    %v510 = vadd.f32 %v503, %v508
    %vm511 = vcmp.ge.f32.partialorder %v509, 0.0
    %vm512 = vcmp.ge.f32.partialorder %v510, 0.0
    %v513 = vmul.f32 %v509, 0.2
    %v514 = vmul.f32 %v510, 0.2
    %v515 = vsel %vm511, %v509, %v513
    %v516 = vsel %vm512, %v510, %v514
    %v517 = vsel %vm60, %v515, -1e+30
    %v518 = vsel %vm61, %v516, -1e+30
    %v519 = vld [vmem:[#allocation2] sm:$0xff]
    %v520 = vld [vmem:[#allocation2 + $0x8] sm:$0xff]
    %521 = vmax.xlane.f32.xlu0 %v517
    %v522 = vpop.xlane.xlu0 %521
    %523 = vmax.xlane.f32.xlu0 %v518
    %v524 = vpop.xlane.xlu0 %523
    %v525 = vmax.f32 %v519, %v522
    %v526 = vmax.f32 %v520, %v524
    %v527 = vsub.f32 %v519, %v525
    %v528 = vsub.f32 %v520, %v526
    %v529 = vmul.f32 %v527, 1.442695
    %v530 = vpow.pop %v529
    %v531 = vmul.f32 %v528, 1.442695
    %v532 = vpow.pop %v531
    %534 = vset.pattern.permute.xlu0 2
    %535 = vperm.xlu0 %534, %v525
    %v536 = vpop.permute.xlu0 %535
    %539 = vset.pattern.permute.xlu0 2
    %540 = vperm.xlu0 %539, %v526
    %v541 = vpop.permute.xlu0 %540
    %v543 = vsub.f32 %v517, %v536
    %v544 = vsub.f32 %v518, %v541
    %v545 = vmul.f32 %v543, 1.442695
    %v546 = vpow.pop %v545
    %v547 = vmul.f32 %v544, 1.442695
    %v548 = vpow.pop %v547
    %v549 = vsel %vm60, %v546, 0.0
    %v550 = vsel %vm61, %v548, 0.0
    %v551 = vld [vmem:[#allocation3] sm:$0xff]
    %v552 = vld [vmem:[#allocation3 + $0x8] sm:$0xff]
    %v553 = vmul.f32 %v530, %v551
    %v554 = vmul.f32 %v532, %v552
    %555 = vadd.xlane.f32.xlu0 %v549
    %v556 = vpop.xlane.xlu0 %555
    %557 = vadd.xlane.f32.xlu0 %v550
    %v558 = vpop.xlane.xlu0 %557
    %v559 = vadd.f32 %v553, %v556
    %v560 = vadd.f32 %v554, %v558
    %vm561 = vcmask 23568
    %562 = vst.msk [vmem:[#allocation3] sm:$0xff] %vm561, %v559
    %563 = vst.msk [vmem:[#allocation3 + $0x8] sm:$0xff] %vm561, %v560
    %v564 = vld [vmem:[#allocation4 + $0x8] sm:$0xff]
    %v565 = vld [vmem:[#allocation4 + $0x18] sm:$0xff]
    %567 = vset.pattern.permute.xlu0 2
    %568 = vperm.xlu0 %567, %v530
    %v569 = vpop.permute.xlu0 %568
    %572 = vset.pattern.permute.xlu0 2
    %573 = vperm.xlu0 %572, %v532
    %v574 = vpop.permute.xlu0 %573
    %v576 = vmul.f32 %v569, %v564
    %v577 = vmul.f32 %v574, %v565
    %v578 = vld [vmem:[#allocation5 + $0x8] sm:$0xff]
    %v579 = vld [vmem:[#allocation5 + $0x18] sm:$0xff]
    %v580 = vld [vmem:[#allocation5 + $0x28] sm:$0xff]
    %v581 = vld [vmem:[#allocation5 + $0x38] sm:$0xff]
    %v582 = vld [vmem:[#allocation5 + $0x48] sm:$0xff]
    %v583 = vld [vmem:[#allocation5 + $0x58] sm:$0xff]
    %v584 = vld [vmem:[#allocation5 + $0x68] sm:$0xff]
    %v585 = vld [vmem:[#allocation5 + $0x78] sm:$0xff]
    %v586 = vld [vmem:[#allocation5 + $0x88] sm:$0xff]
    %v587 = vld [vmem:[#allocation5 + $0x98] sm:$0xff]
    %v588 = vld [vmem:[#allocation5 + $0xa8] sm:$0xff]
    %v589 = vld [vmem:[#allocation5 + $0xb8] sm:$0xff]
    %v590 = vld [vmem:[#allocation5 + $0xc8] sm:$0xff]
    %v591 = vld [vmem:[#allocation5 + $0xd8] sm:$0xff]
    %v592 = vld [vmem:[#allocation5 + $0xe8] sm:$0xff]
    %v593 = vld [vmem:[#allocation5 + $0xf8] sm:$0xff]
    %594 = vmatprep.subr.mxu0 0.0
    %595 = vmatpush1.msra.mxu0 %v593
    %596 = vmatprep.subr.mxu0 0.0
    %597 = vmatpush1.msra.mxu0 %v592
    %598 = vmatprep.subr.mxu0 0.0
    %599 = vmatpush1.msra.mxu0 %v591
    %600 = vmatprep.subr.mxu0 0.0
    %601 = vmatpush1.msra.mxu0 %v590
    %602 = vmatprep.subr.mxu0 0.0
    %603 = vmatpush1.msra.mxu0 %v589
    %604 = vmatprep.subr.mxu0 0.0
    %605 = vmatpush1.msra.mxu0 %v588
    %606 = vmatprep.subr.mxu0 0.0
    %607 = vmatpush1.msra.mxu0 %v587
    %608 = vmatprep.subr.mxu0 0.0
    %609 = vmatpush1.msra.mxu0 %v586
    %610 = vmatprep.subr.mxu0 0.0
    %611 = vmatpush1.msra.mxu0 %v585
    %612 = vmatprep.subr.mxu0 0.0
    %613 = vmatpush1.msra.mxu0 %v584
    %614 = vmatprep.subr.mxu0 0.0
    %615 = vmatpush1.msra.mxu0 %v583
    %616 = vmatprep.subr.mxu0 0.0
    %617 = vmatpush1.msra.mxu0 %v582
    %618 = vmatprep.subr.mxu0 0.0
    %619 = vmatpush1.msra.mxu0 %v581
    %620 = vmatprep.subr.mxu0 0.0
    %621 = vmatpush1.msra.mxu0 %v580
    %622 = vmatprep.subr.mxu0 0.0
    %623 = vmatpush1.msra.mxu0 %v579
    %624 = vmatprep.subr.mxu0 0.0
    %625 = vmatpush1.msra.mxu0 %v578
    %626 = vmatprep.subr.mxu0 0.0
    %627 = vmatpush2.msra.mxu0 0.0
    %628 = vmatprep.subr.mxu0 0.0
    %629 = vmatpush2.msra.mxu0 0.0
    %630 = vmatprep.subr.mxu0 0.0
    %631 = vmatpush2.msra.mxu0 0.0
    %632 = vmatprep.subr.mxu0 0.0
    %633 = vmatpush2.msra.mxu0 0.0
    %634 = vmatprep.subr.mxu0 0.0
    %635 = vmatpush2.msra.mxu0 0.0
    %636 = vmatprep.subr.mxu0 0.0
    %637 = vmatpush2.msra.mxu0 0.0
    %638 = vmatprep.subr.mxu0 0.0
    %639 = vmatpush2.msra.mxu0 0.0
    %640 = vmatprep.subr.mxu0 0.0
    %641 = vmatpush2.msra.mxu0 0.0
    %642 = vmatprep.subr.mxu0 0.0
    %643 = vmatpush2.msra.mxu0 0.0
    %644 = vmatprep.subr.mxu0 0.0
    %645 = vmatpush2.msra.mxu0 0.0
    %646 = vmatprep.subr.mxu0 0.0
    %647 = vmatpush2.msra.mxu0 0.0
    %648 = vmatprep.subr.mxu0 0.0
    %649 = vmatpush2.msra.mxu0 0.0
    %650 = vmatprep.subr.mxu0 0.0
    %651 = vmatpush2.msra.mxu0 0.0
    %652 = vmatprep.subr.mxu0 0.0
    %653 = vmatpush2.msra.mxu0 0.0
    %654 = vmatprep.subr.mxu0 0.0
    %655 = vmatpush2.msra.mxu0 0.0
    %656 = vmatprep.subr.mxu0 0.0
    %657 = vmatpush2.msra.mxu0 0.0
    %658 = vmatprep.mubr.f32.mxu0 0.0
    %659 = vmatmul.mubr.f32.gmra.mxu0 %v549
    %v660 = vpop.f32.mrf.mxu0
    %v661 = vadd.f32 0.0, %v660
    %v662 = vpop.f32.mrf.mxu0
    %663 = vmatprep.mubr.f32.mxu0 0.0
    %664 = vmatmul.mubr.f32.gmra.mxu0 %v550
    %v665 = vpop.f32.mrf.mxu0
    %v666 = vadd.f32 0.0, %v665
    %v667 = vpop.f32.mrf.mxu0
    %668 = vdwg.mxu0
    %v669 = vadd.f32 %v576, %v661
    %v670 = vadd.f32 %v577, %v666
    %671 = vst.msk [vmem:[#allocation4 + $0x8] sm:$0xff] %vm241, %v669
    %672 = vst.msk [vmem:[#allocation4 + $0x18] sm:$0xff] %vm241, %v670
    %673 = vst.msk [vmem:[#allocation2] sm:$0xff] %vm561, %v525
    %674 = vst.msk [vmem:[#allocation2 + $0x8] sm:$0xff] %vm561, %v526
    %675 = vset.pattern.permute.xlu0 3
    %676 = vperm.xlu0 %675, %v63
    %v677 = vpop.permute.xlu0 %676
    %679 = vset.pattern.permute.xlu0 3
    %680 = vperm.xlu0 %679, %v64
    %v681 = vpop.permute.xlu0 %680
    %v683 = vlaneseq
    %v684 = vshrl.u32 %v683, 7
    %v685 = vsub.s32 3, %v684
    %v686 = vrot.slane %v62, %v685
    %v687 = vadd.f32 %v677, %v686
    %v688 = vadd.f32 %v681, %v686
    %vm689 = vcmp.ge.f32.partialorder %v687, 0.0
    %vm690 = vcmp.ge.f32.partialorder %v688, 0.0
    %v691 = vmul.f32 %v687, 0.2
    %v692 = vmul.f32 %v688, 0.2
    %v693 = vsel %vm689, %v687, %v691
    %v694 = vsel %vm690, %v688, %v692
    %v695 = vsel %vm60, %v693, -1e+30
    %v696 = vsel %vm61, %v694, -1e+30
    %v697 = vld [vmem:[#allocation2] sm:$0xff]
    %v698 = vld [vmem:[#allocation2 + $0x8] sm:$0xff]
    %699 = vmax.xlane.f32.xlu0 %v695
    %v700 = vpop.xlane.xlu0 %699
    %701 = vmax.xlane.f32.xlu0 %v696
    %v702 = vpop.xlane.xlu0 %701
    %v703 = vmax.f32 %v697, %v700
    %v704 = vmax.f32 %v698, %v702
    %v705 = vsub.f32 %v697, %v703
    %v706 = vsub.f32 %v698, %v704
    %v707 = vmul.f32 %v705, 1.442695
    %v708 = vpow.pop %v707
    %v709 = vmul.f32 %v706, 1.442695
    %v710 = vpow.pop %v709
    %712 = vset.pattern.permute.xlu0 3
    %713 = vperm.xlu0 %712, %v703
    %v714 = vpop.permute.xlu0 %713
    %717 = vset.pattern.permute.xlu0 3
    %718 = vperm.xlu0 %717, %v704
    %v719 = vpop.permute.xlu0 %718
    %v721 = vsub.f32 %v695, %v714
    %v722 = vsub.f32 %v696, %v719
    %v723 = vmul.f32 %v721, 1.442695
    %v724 = vpow.pop %v723
    %v725 = vmul.f32 %v722, 1.442695
    %v726 = vpow.pop %v725
    %v727 = vsel %vm60, %v724, 0.0
    %v728 = vsel %vm61, %v726, 0.0
    %v729 = vld [vmem:[#allocation3] sm:$0xff]
    %v730 = vld [vmem:[#allocation3 + $0x8] sm:$0xff]
    %v731 = vmul.f32 %v708, %v729
    %v732 = vmul.f32 %v710, %v730
    %733 = vadd.xlane.f32.xlu0 %v727
    %v734 = vpop.xlane.xlu0 %733
    %735 = vadd.xlane.f32.xlu0 %v728
    %v736 = vpop.xlane.xlu0 %735
    %v737 = vadd.f32 %v731, %v734
    %v738 = vadd.f32 %v732, %v736
    %vm739 = vcmask 31768
    %740 = vst.msk [vmem:[#allocation3] sm:$0xff] %vm739, %v737
    %741 = vst.msk [vmem:[#allocation3 + $0x8] sm:$0xff] %vm739, %v738
    %v742 = vld [vmem:[#allocation4 + $0x8] sm:$0xff]
    %v743 = vld [vmem:[#allocation4 + $0x18] sm:$0xff]
    %745 = vset.pattern.permute.xlu0 3
    %746 = vperm.xlu0 %745, %v708
    %v747 = vpop.permute.xlu0 %746
    %750 = vset.pattern.permute.xlu0 3
    %751 = vperm.xlu0 %750, %v710
    %v752 = vpop.permute.xlu0 %751
    %v754 = vmul.f32 %v747, %v742
    %v755 = vmul.f32 %v752, %v743
    %v756 = vld [vmem:[#allocation5 + $0x8] sm:$0xff]
    %v757 = vld [vmem:[#allocation5 + $0x18] sm:$0xff]
    %v758 = vld [vmem:[#allocation5 + $0x28] sm:$0xff]
    %v759 = vld [vmem:[#allocation5 + $0x38] sm:$0xff]
    %v760 = vld [vmem:[#allocation5 + $0x48] sm:$0xff]
    %v761 = vld [vmem:[#allocation5 + $0x58] sm:$0xff]
    %v762 = vld [vmem:[#allocation5 + $0x68] sm:$0xff]
    %v763 = vld [vmem:[#allocation5 + $0x78] sm:$0xff]
    %v764 = vld [vmem:[#allocation5 + $0x88] sm:$0xff]
    %v765 = vld [vmem:[#allocation5 + $0x98] sm:$0xff]
    %v766 = vld [vmem:[#allocation5 + $0xa8] sm:$0xff]
    %v767 = vld [vmem:[#allocation5 + $0xb8] sm:$0xff]
    %v768 = vld [vmem:[#allocation5 + $0xc8] sm:$0xff]
    %v769 = vld [vmem:[#allocation5 + $0xd8] sm:$0xff]
    %v770 = vld [vmem:[#allocation5 + $0xe8] sm:$0xff]
    %v771 = vld [vmem:[#allocation5 + $0xf8] sm:$0xff]
    %788 = vrot.lane.b32.xlu0 %v756, 64
    %v789 = vpop.permute.xlu0 %788
    %790 = vrot.lane.b32.xlu0 %v757, 64
    %v791 = vpop.permute.xlu0 %790
    %792 = vrot.lane.b32.xlu0 %v758, 64
    %v793 = vpop.permute.xlu0 %792
    %794 = vrot.lane.b32.xlu0 %v759, 64
    %v795 = vpop.permute.xlu0 %794
    %796 = vrot.lane.b32.xlu0 %v760, 64
    %v797 = vpop.permute.xlu0 %796
    %798 = vrot.lane.b32.xlu0 %v761, 64
    %v799 = vpop.permute.xlu0 %798
    %800 = vrot.lane.b32.xlu0 %v762, 64
    %v801 = vpop.permute.xlu0 %800
    %802 = vrot.lane.b32.xlu0 %v763, 64
    %v803 = vpop.permute.xlu0 %802
    %804 = vrot.lane.b32.xlu0 %v764, 64
    %v805 = vpop.permute.xlu0 %804
    %806 = vrot.lane.b32.xlu0 %v765, 64
    %v807 = vpop.permute.xlu0 %806
    %808 = vrot.lane.b32.xlu0 %v766, 64
    %v809 = vpop.permute.xlu0 %808
    %810 = vrot.lane.b32.xlu0 %v767, 64
    %v811 = vpop.permute.xlu0 %810
    %812 = vrot.lane.b32.xlu0 %v768, 64
    %v813 = vpop.permute.xlu0 %812
    %814 = vrot.lane.b32.xlu0 %v769, 64
    %v815 = vpop.permute.xlu0 %814
    %816 = vrot.lane.b32.xlu0 %v770, 64
    %v817 = vpop.permute.xlu0 %816
    %818 = vrot.lane.b32.xlu0 %v771, 64
    %v819 = vpop.permute.xlu0 %818
    %836 = vmatprep.subr.mxu0 0.0
    %837 = vmatpush1.msra.mxu0 %v819
    %838 = vmatprep.subr.mxu0 0.0
    %839 = vmatpush1.msra.mxu0 %v817
    %840 = vmatprep.subr.mxu0 0.0
    %841 = vmatpush1.msra.mxu0 %v815
    %842 = vmatprep.subr.mxu0 0.0
    %843 = vmatpush1.msra.mxu0 %v813
    %844 = vmatprep.subr.mxu0 0.0
    %845 = vmatpush1.msra.mxu0 %v811
    %846 = vmatprep.subr.mxu0 0.0
    %847 = vmatpush1.msra.mxu0 %v809
    %848 = vmatprep.subr.mxu0 0.0
    %849 = vmatpush1.msra.mxu0 %v807
    %850 = vmatprep.subr.mxu0 0.0
    %851 = vmatpush1.msra.mxu0 %v805
    %852 = vmatprep.subr.mxu0 0.0
    %853 = vmatpush1.msra.mxu0 %v803
    %854 = vmatprep.subr.mxu0 0.0
    %855 = vmatpush1.msra.mxu0 %v801
    %856 = vmatprep.subr.mxu0 0.0
    %857 = vmatpush1.msra.mxu0 %v799
    %858 = vmatprep.subr.mxu0 0.0
    %859 = vmatpush1.msra.mxu0 %v797
    %860 = vmatprep.subr.mxu0 0.0
    %861 = vmatpush1.msra.mxu0 %v795
    %862 = vmatprep.subr.mxu0 0.0
    %863 = vmatpush1.msra.mxu0 %v793
    %864 = vmatprep.subr.mxu0 0.0
    %865 = vmatpush1.msra.mxu0 %v791
    %866 = vmatprep.subr.mxu0 0.0
    %867 = vmatpush1.msra.mxu0 %v789
    %868 = vmatprep.subr.mxu0 0.0
    %869 = vmatpush2.msra.mxu0 0.0
    %870 = vmatprep.subr.mxu0 0.0
    %871 = vmatpush2.msra.mxu0 0.0
    %872 = vmatprep.subr.mxu0 0.0
    %873 = vmatpush2.msra.mxu0 0.0
    %874 = vmatprep.subr.mxu0 0.0
    %875 = vmatpush2.msra.mxu0 0.0
    %876 = vmatprep.subr.mxu0 0.0
    %877 = vmatpush2.msra.mxu0 0.0
    %878 = vmatprep.subr.mxu0 0.0
    %879 = vmatpush2.msra.mxu0 0.0
    %880 = vmatprep.subr.mxu0 0.0
    %881 = vmatpush2.msra.mxu0 0.0
    %882 = vmatprep.subr.mxu0 0.0
    %883 = vmatpush2.msra.mxu0 0.0
    %884 = vmatprep.subr.mxu0 0.0
    %885 = vmatpush2.msra.mxu0 0.0
    %886 = vmatprep.subr.mxu0 0.0
    %887 = vmatpush2.msra.mxu0 0.0
    %888 = vmatprep.subr.mxu0 0.0
    %889 = vmatpush2.msra.mxu0 0.0
    %890 = vmatprep.subr.mxu0 0.0
    %891 = vmatpush2.msra.mxu0 0.0
    %892 = vmatprep.subr.mxu0 0.0
    %893 = vmatpush2.msra.mxu0 0.0
    %894 = vmatprep.subr.mxu0 0.0
    %895 = vmatpush2.msra.mxu0 0.0
    %896 = vmatprep.subr.mxu0 0.0
    %897 = vmatpush2.msra.mxu0 0.0
    %898 = vmatprep.subr.mxu0 0.0
    %899 = vmatpush2.msra.mxu0 0.0
    %900 = vmatprep.mubr.f32.mxu0 0.0
    %901 = vmatmul.mubr.f32.gmra.mxu0 %v727
    %v902 = vpop.f32.mrf.mxu0
    %v903 = vadd.f32 0.0, %v902
    %v904 = vpop.f32.mrf.mxu0
    %905 = vmatprep.mubr.f32.mxu0 0.0
    %906 = vmatmul.mubr.f32.gmra.mxu0 %v728
    %v907 = vpop.f32.mrf.mxu0
    %v908 = vadd.f32 0.0, %v907
    %v909 = vpop.f32.mrf.mxu0
    %910 = vdwg.mxu0
    %913 = vrot.lane.b32.xlu0 %v903, 64
    %v914 = vpop.permute.xlu0 %913
    %915 = vrot.lane.b32.xlu0 %v908, 64
    %v916 = vpop.permute.xlu0 %915
    %v919 = vadd.f32 %v754, %v914
    %v920 = vadd.f32 %v755, %v916
    %921 = vst.msk [vmem:[#allocation4 + $0x8] sm:$0xff] %vm492, %v919
    %922 = vst.msk [vmem:[#allocation4 + $0x18] sm:$0xff] %vm492, %v920
    %923 = vst.msk [vmem:[#allocation2] sm:$0xff] %vm739, %v703
    %924 = vst.msk [vmem:[#allocation2 + $0x8] sm:$0xff] %vm739, %v704
    // Predicated region
    $region30: #{tpu_custom_call.1} parent=1 // pred_check
      %p925 = pneg %p36
    $region31: #{tpu_custom_call.1} parent=1 // pred_check_branch
      %927 = sbr.rel (%p925) target = $region33
    $region32: #{tpu_custom_call.1} parent=1 // pred_region
      %v928 = vld [vmem:[#allocation3] sm:$0xff]
      %v929 = vld [vmem:[#allocation3 + $0x8] sm:$0xff]
      %v930 = vmax.f32 %v928, 1e-20
      %v931 = vmax.f32 %v929, 1e-20
      %v932 = vld [vmem:[#allocation4] sm:$0xff]
      %v933 = vld [vmem:[#allocation4 + $0x10] sm:$0xff]
      %935 = vset.pattern.permute.xlu0 0
      %936 = vperm.xlu0 %935, %v930
      %v937 = vpop.permute.xlu0 %936
      %940 = vset.pattern.permute.xlu0 0
      %941 = vperm.xlu0 %940, %v931
      %v942 = vpop.permute.xlu0 %941
      %v944 = vrcp.pop %v937
      %v945 = vmul.f32 %v932, %v944
      %v946 = vrcp.pop %v942
      %v947 = vmul.f32 %v933, %v946
      %948 = vset.pattern.permute.xlu0 1
      %949 = vperm.xlu0 %948, %v930
      %v950 = vpop.permute.xlu0 %949
      %952 = vset.pattern.permute.xlu0 1
      %953 = vperm.xlu0 %952, %v931
      %v954 = vpop.permute.xlu0 %953
      %v956 = vrcp.pop %v950
      %v957 = vmul.f32 %v932, %v956
      %v958 = vrcp.pop %v954
      %v959 = vmul.f32 %v933, %v958
      %v960 = vld [vmem:[#allocation4 + $0x8] sm:$0xff]
      %v961 = vld [vmem:[#allocation4 + $0x18] sm:$0xff]
      %962 = vset.pattern.permute.xlu0 2
      %963 = vperm.xlu0 %962, %v930
      %v964 = vpop.permute.xlu0 %963
      %966 = vset.pattern.permute.xlu0 2
      %967 = vperm.xlu0 %966, %v931
      %v968 = vpop.permute.xlu0 %967
      %v970 = vrcp.pop %v964
      %v971 = vmul.f32 %v960, %v970
      %v972 = vrcp.pop %v968
      %v973 = vmul.f32 %v961, %v972
      %974 = vset.pattern.permute.xlu0 3
      %975 = vperm.xlu0 %974, %v930
      %v976 = vpop.permute.xlu0 %975
      %978 = vset.pattern.permute.xlu0 3
      %979 = vperm.xlu0 %978, %v931
      %v980 = vpop.permute.xlu0 %979
      %v982 = vrcp.pop %v976
      %v983 = vmul.f32 %v960, %v982
      %v984 = vrcp.pop %v980
      %v985 = vmul.f32 %v961, %v984
      %v986 = vsel %vm241, %v945, %v957
      %v987 = vsel %vm241, %v947, %v959
      %v988 = vsel %vm241, %v971, %v983
      %v989 = vsel %vm241, %v973, %v985
      %v990 = vld [vmem:[%s4] sm:$0x3]
      %v992 = vlaneseq
      %v993 = vshrl.u32 %v992, 7
      %v994 = vsub.s32 0, %v993
      %v995 = vrot.slane %v990, %v994
      %v996 = vlaneseq
      %v997 = vshrl.u32 %v996, 7
      %v998 = vsub.s32 1, %v997
      %v999 = vrot.slane %v990, %v998
      %v1002 = vadd.f32 %v986, %v995
      %v1003 = vadd.f32 %v988, %v999
      %v1004 = vadd.f32 %v987, %v995
      %v1005 = vadd.f32 %v989, %v999
      %vm1006 = vcmp.gt.f32.partialorder %v1002, 0.0
      %vm1007 = vcmp.gt.f32.partialorder %v1003, 0.0
      %vm1008 = vcmp.gt.f32.partialorder %v1004, 0.0
      %vm1009 = vcmp.gt.f32.partialorder %v1005, 0.0
      %v1010 = vmul.f32 %v1002, 1.442695
      %v1011 = vpow.pop %v1010
      %v1012 = vmul.f32 %v1003, 1.442695
      %v1013 = vpow.pop %v1012
      %v1014 = vmul.f32 %v1004, 1.442695
      %v1015 = vpow.pop %v1014
      %v1016 = vmul.f32 %v1005, 1.442695
      %v1017 = vpow.pop %v1016
      %v1018 = vsub.f32 %v1011, 1.0
      %v1019 = vsub.f32 %v1013, 1.0
      %v1020 = vsub.f32 %v1015, 1.0
      %v1021 = vsub.f32 %v1017, 1.0
      %v1022 = vsel %vm1006, %v1002, %v1018
      %v1023 = vsel %vm1007, %v1003, %v1019
      %v1024 = vsel %vm1008, %v1004, %v1020
      %v1025 = vsel %vm1009, %v1005, %v1021
      %1026 = vst [vmem:[#allocation8] sm:$0xff] %v1022
      %1027 = vst [vmem:[#allocation8 + $0x8] sm:$0xff] %v1023
      %1028 = vst [vmem:[#allocation8 + $0x10] sm:$0xff] %v1024
      %1029 = vst [vmem:[#allocation8 + $0x18] sm:$0xff] %v1025
    $region33: #{tpu_custom_call.1} parent=1 // pred_fallthru
      _
    // Predicated region
    $region34: #{tpu_custom_call.1} parent=1 // pred_check
      _
    $region35: #{tpu_custom_call.1} parent=1 // pred_check_branch
      %1031 = sbr.rel (0) target = $region37
    $region36: #{tpu_custom_call.1} parent=1 // pred_region
      %s1033 = ssub.s32 512, 512
      %1034 = vsyncadd [#allocation7], %s1033
      %s1035 = sshll.u32 [#allocation8], 4
      %s1036 = int_to_ptr.vmem [resolvable:$true] %s1035
      %1041 = dma.vmem_to_hbm [thread:$0]  %s1036, 512, %s5, [#allocation7], 256, 256, 16
    $region37: #{tpu_custom_call.1} parent=1 // pred_fallthru
      _
    // Predicated region
    $region38: #{tpu_custom_call.1} parent=1 // pred_check
      _
    $region39: #{tpu_custom_call.1} parent=1 // pred_check_branch
      %1043 = sbr.rel (0) target = $region41
    $region40: #{tpu_custom_call.1} parent=1 // pred_region
      %1044 = dma.done [#allocation7], 512
    $region41: #{tpu_custom_call.1} parent=1 // pred_fallthru
      _
    %1045 = vsyncpa [#allocation6], 1
    %1046 = vsyncpa [#allocation7], 1

</llo_original>
